<compile_context>
chip_gen: v7x
topology: tpu7x:2x2x1
jax: 0.10.0
libtpu: 0.0.40
codegen_flags: <defaults>
</compile_context>

<pallas_src>
import math
from functools import partial

import jax
import jax.numpy as jnp
from jax.experimental import pallas as pl
from jax.experimental.pallas import tpu as pltpu


def _transformer_block_kernel(num_heads, eps,
                              x_ref, cond_ref,
                              a1w_ref, a1b_ref,
                              qkvw_ref, qkvb_ref,
                              ow_ref, ob_ref,
                              a2w_ref, a2b_ref,
                              w1_ref, b1_ref,
                              w2_ref, b2_ref,
                              o_ref):
    """One batch element per grid step.

    x_ref:    (1, S, E)      input tokens
    cond_ref: (1, 1, Dc)     conditioning embedding
    a*_ref:   AdaLN projection weights (Dc, 2E) / bias (1, 2E)
    qkv*_ref: attention in-proj weight (E, 3E) / bias (1, 3E)
    o*_ref:   attention out-proj weight (E, E) / bias (1, E)
    w1/b1:    MLP first linear  (E, H) / (1, H)
    w2/b2:    MLP second linear (H, E) / (1, E)
    o_ref:    (1, S, E) output
    """
    S, E = x_ref.shape[1], x_ref.shape[2]
    hd = E // num_heads
    inv_sqrt_hd = 1.0 / math.sqrt(hd)

    x = x_ref[0].astype(jnp.float32)            # (S, E)
    cond = cond_ref[0].astype(jnp.float32)      # (1, Dc)
    cond_act = cond * jax.nn.sigmoid(cond)      # SiLU(cond), shared by both AdaLNs

    def layernorm(v):
        mu = jnp.mean(v, axis=-1, keepdims=True)
        var = jnp.mean((v - mu) * (v - mu), axis=-1, keepdims=True)
        return (v - mu) * jax.lax.rsqrt(var + eps)

    def adaln(v, w_ref, b_ref):
        ss = jnp.dot(cond_act, w_ref[...],
                     preferred_element_type=jnp.float32) + b_ref[...]   # (1, 2E)
        scale = ss[:, :E]
        shift = ss[:, E:]
        return layernorm(v) * (1.0 + scale) + shift

    # ---------------- attention branch ----------------
    xn = adaln(x, a1w_ref, a1b_ref)                                      # (S, E)
    qkv = jnp.dot(xn, qkvw_ref[...],
                  preferred_element_type=jnp.float32) + qkvb_ref[...]    # (S, 3E)
    q_all = qkv[:, :E]
    k_all = qkv[:, E:2 * E]
    v_all = qkv[:, 2 * E:]

    attn = jnp.zeros((S, E), dtype=jnp.float32)
    for h in range(num_heads):                      # static unroll over heads
        lo, hi = h * hd, (h + 1) * hd
        qh = q_all[:, lo:hi]                        # (S, hd)
        kh = k_all[:, lo:hi]
        vh = v_all[:, lo:hi]
        s = jax.lax.dot_general(qh, kh, (((1,), (1,)), ((), ())),
                                preferred_element_type=jnp.float32) * inv_sqrt_hd
        s = s - jnp.max(s, axis=-1, keepdims=True)
        p = jnp.exp(s)
        p = p / jnp.sum(p, axis=-1, keepdims=True)
        oh = jnp.dot(p, vh, preferred_element_type=jnp.float32)          # (S, hd)
        # Fold this head straight into the lane-dense out-projection:
        #   concat(heads) @ Wo == sum_h head_h @ Wo[h*hd:(h+1)*hd, :]
        attn = attn + jnp.dot(oh, ow_ref[lo:hi, :],
                              preferred_element_type=jnp.float32)
    x = x + attn + ob_ref[...]                                           # residual

    # ---------------- MLP branch ----------------
    xn = adaln(x, a2w_ref, a2b_ref)
    hid = jnp.dot(xn, w1_ref[...],
                  preferred_element_type=jnp.float32) + b1_ref[...]      # (S, H)
    hid = hid * jax.nn.sigmoid(hid)                                      # SiLU
    y = jnp.dot(hid, w2_ref[...],
                preferred_element_type=jnp.float32) + b2_ref[...]        # (S, E)
    o_ref[0] = (x + y).astype(o_ref.dtype)                               # residual


def transformer_block_forward(x, cond_embedding, params, *, num_heads, eps=1e-5):
    """Equivalent of TransformerBlock.forward(x, cond_embedding).

    x:              (B, S, E) float32   (batch_first)
    cond_embedding: (B, Dc)   float32
    params: dict of PyTorch-layout parameters (see __main__).
    """
    B, S, E = x.shape
    Dc = cond_embedding.shape[-1]
    Hm = params["mlp_b1"].shape[0]

    # Weights transposed once to right-multiply layout (cheap, one-time).
    a1w = params["adaln1_w"].T                        # (Dc, 2E)
    a1b = params["adaln1_b"].reshape(1, 2 * E)
    qkvw = params["in_proj_w"].T                      # (E, 3E)
    qkvb = params["in_proj_b"].reshape(1, 3 * E)
    ow = params["out_proj_w"].T                       # (E, E)
    ob = params["out_proj_b"].reshape(1, E)
    a2w = params["adaln2_w"].T                        # (Dc, 2E)
    a2b = params["adaln2_b"].reshape(1, 2 * E)
    w1 = params["mlp_w1"].T                           # (E, Hm)
    b1 = params["mlp_b1"].reshape(1, Hm)
    w2 = params["mlp_w2"].T                           # (Hm, E)
    b2 = params["mlp_b2"].reshape(1, E)

    cond3 = cond_embedding.reshape(B, 1, Dc)

    kernel = partial(_transformer_block_kernel, num_heads, eps)
    rep = lambda b: (0, 0)                            # weights: same block every step

    out = pl.pallas_call(
        kernel,
        out_shape=jax.ShapeDtypeStruct((B, S, E), x.dtype),
        grid_spec=pltpu.PrefetchScalarGridSpec(
            num_scalar_prefetch=0,
            grid=(B,),
            in_specs=[
                pl.BlockSpec((1, S, E), lambda b: (b, 0, 0)),      # x
                pl.BlockSpec((1, 1, Dc), lambda b: (b, 0, 0)),     # cond
                pl.BlockSpec((Dc, 2 * E), rep),                    # adaln1 w
                pl.BlockSpec((1, 2 * E), rep),                     # adaln1 b
                pl.BlockSpec((E, 3 * E), rep),                     # in_proj w
                pl.BlockSpec((1, 3 * E), rep),                     # in_proj b
                pl.BlockSpec((E, E), rep),                         # out_proj w
                pl.BlockSpec((1, E), rep),                         # out_proj b
                pl.BlockSpec((Dc, 2 * E), rep),                    # adaln2 w
                pl.BlockSpec((1, 2 * E), rep),                     # adaln2 b
                pl.BlockSpec((E, Hm), rep),                        # mlp w1
                pl.BlockSpec((1, Hm), rep),                        # mlp b1
                pl.BlockSpec((Hm, E), rep),                        # mlp w2
                pl.BlockSpec((1, E), rep),                         # mlp b2
            ],
            out_specs=pl.BlockSpec((1, S, E), lambda b: (b, 0, 0)),
        ),
        compiler_params=pltpu.CompilerParams(
            dimension_semantics=("parallel",),
            vmem_limit_bytes=64 * 1024 * 1024,
        ),
    )(x, cond3, a1w, a1b, qkvw, qkvb, ow, ob, a2w, a2b, w1, b1, w2, b2)
    return out


if __name__ == "__main__":
    key = jax.random.PRNGKey(0)
    keys = jax.random.split(key, 12)

    B, S, E = 2, 8, 32
    num_heads = 4
    Dc = 32
    Hm = int(E * 4.0)

    x = jax.random.normal(keys[0], (B, S, E), jnp.float32)
    cond = jax.random.normal(keys[1], (B, Dc), jnp.float32)

    def xavier(k, shape):
        fan_out, fan_in = shape
        bound = math.sqrt(6.0 / (fan_in + fan_out))
        return jax.random.uniform(k, shape, jnp.float32, -bound, bound)

    # NOTE: the PyTorch module zero-initializes the AdaLN projections (so that
    # scale=shift=0 at init); small random values are used here instead so the
    # scale/shift path of the kernel is actually exercised by the check.
    params = {
        "adaln1_w": 0.05 * jax.random.normal(keys[2], (2 * E, Dc), jnp.float32),
        "adaln1_b": 0.05 * jax.random.normal(keys[3], (2 * E,), jnp.float32),
        "in_proj_w": xavier(keys[4], (3 * E, E)),
        "in_proj_b": 0.05 * jax.random.normal(keys[5], (3 * E,), jnp.float32),
        "out_proj_w": xavier(keys[6], (E, E)),
        "out_proj_b": 0.05 * jax.random.normal(keys[7], (E,), jnp.float32),
        "adaln2_w": 0.05 * jax.random.normal(keys[8], (2 * E, Dc), jnp.float32),
        "adaln2_b": 0.05 * jax.random.normal(keys[9], (2 * E,), jnp.float32),
        "mlp_w1": xavier(keys[10], (Hm, E)),
        "mlp_b1": jnp.zeros((Hm,), jnp.float32),
        "mlp_w2": xavier(keys[11], (E, Hm)),
        "mlp_b2": jnp.zeros((E,), jnp.float32),
    }

    out = transformer_block_forward(x, cond, params, num_heads=num_heads)
    out = jax.block_until_ready(out)

    # ---------------- pure-JAX reference ----------------
    def silu(v):
        return v * jax.nn.sigmoid(v)

    def layernorm(v, eps=1e-5):
        mu = jnp.mean(v, axis=-1, keepdims=True)
        var = jnp.mean((v - mu) ** 2, axis=-1, keepdims=True)
        return (v - mu) / jnp.sqrt(var + eps)

    with jax.default_matmul_precision("highest"):
        def adaln(v, w, b):
            ss = silu(cond) @ w.T + b                    # (B, 2E)
            return layernorm(v) * (1.0 + ss[:, None, :E]) + ss[:, None, E:]

        hd = E // num_heads
        xn = adaln(x, params["adaln1_w"], params["adaln1_b"])
        qkv = xn @ params["in_proj_w"].T + params["in_proj_b"]
        q, k_, v_ = jnp.split(qkv, 3, axis=-1)
        q = q.reshape(B, S, num_heads, hd).transpose(0, 2, 1, 3)
        k_ = k_.reshape(B, S, num_heads, hd).transpose(0, 2, 1, 3)
        v_ = v_.reshape(B, S, num_heads, hd).transpose(0, 2, 1, 3)
        scores = jnp.einsum("bhqd,bhkd->bhqk", q, k_) / math.sqrt(hd)
        p = jax.nn.softmax(scores, axis=-1)
        ao = jnp.einsum("bhqk,bhkd->bhqd", p, v_)
        ao = ao.transpose(0, 2, 1, 3).reshape(B, S, E)
        ao = ao @ params["out_proj_w"].T + params["out_proj_b"]
        x1 = x + ao
        xn2 = adaln(x1, params["adaln2_w"], params["adaln2_b"])
        h1 = silu(xn2 @ params["mlp_w1"].T + params["mlp_b1"])
        ref = x1 + (h1 @ params["mlp_w2"].T + params["mlp_b2"])

    assert out.shape == (B, S, E), out.shape
    max_err = float(jnp.max(jnp.abs(out - ref)))
    assert jnp.allclose(out, ref, atol=2e-3, rtol=2e-3), max_err

    print("KERNEL_OK")
</pallas_src>

<mosaic_0001>
module attributes {stable_mosaic.version = 11 : i64} {
  func.func @_transformer_block_kernel(%arg0: i32, %arg1: memref<1x8x32xf32, #tpu.memory_space<vmem>>, %arg2: memref<1x1x32xf32, #tpu.memory_space<vmem>>, %arg3: memref<32x64xf32, #tpu.memory_space<vmem>>, %arg4: memref<1x64xf32, #tpu.memory_space<vmem>>, %arg5: memref<32x96xf32, #tpu.memory_space<vmem>>, %arg6: memref<1x96xf32, #tpu.memory_space<vmem>>, %arg7: memref<32x32xf32, #tpu.memory_space<vmem>>, %arg8: memref<1x32xf32, #tpu.memory_space<vmem>>, %arg9: memref<32x64xf32, #tpu.memory_space<vmem>>, %arg10: memref<1x64xf32, #tpu.memory_space<vmem>>, %arg11: memref<32x128xf32, #tpu.memory_space<vmem>>, %arg12: memref<1x128xf32, #tpu.memory_space<vmem>>, %arg13: memref<128x32xf32, #tpu.memory_space<vmem>>, %arg14: memref<1x32xf32, #tpu.memory_space<vmem>>, %arg15: memref<1x8x32xf32, #tpu.memory_space<vmem>>) attributes {dimension_semantics = [#tpu.dimension_semantics<parallel>], iteration_bounds = array<i64: 2>, scalar_prefetch = 0 : i64, scratch_operands = 0 : i64, tpu.core_type = #tpu.core_type<tc>, window_params = [{transform_indices = @transform_0, window_bounds = array<i64: 1, 8, 32>}, {transform_indices = @transform_1, window_bounds = array<i64: 1, 1, 32>}, {pipeline_mode = #tpu.pipeline_mode<synchronous>, transform_indices = @transform_2, window_bounds = array<i64: 32, 64>}, {pipeline_mode = #tpu.pipeline_mode<synchronous>, transform_indices = @transform_3, window_bounds = array<i64: 1, 64>}, {pipeline_mode = #tpu.pipeline_mode<synchronous>, transform_indices = @transform_4, window_bounds = array<i64: 32, 96>}, {pipeline_mode = #tpu.pipeline_mode<synchronous>, transform_indices = @transform_5, window_bounds = array<i64: 1, 96>}, {pipeline_mode = #tpu.pipeline_mode<synchronous>, transform_indices = @transform_6, window_bounds = array<i64: 32, 32>}, {pipeline_mode = #tpu.pipeline_mode<synchronous>, transform_indices = @transform_7, window_bounds = array<i64: 1, 32>}, {pipeline_mode = #tpu.pipeline_mode<synchronous>, transform_indices = @transform_8, window_bounds = array<i64: 32, 64>}, {pipeline_mode = #tpu.pipeline_mode<synchronous>, transform_indices = @transform_9, window_bounds = array<i64: 1, 64>}, {pipeline_mode = #tpu.pipeline_mode<synchronous>, transform_indices = @transform_10, window_bounds = array<i64: 32, 128>}, {pipeline_mode = #tpu.pipeline_mode<synchronous>, transform_indices = @transform_11, window_bounds = array<i64: 1, 128>}, {pipeline_mode = #tpu.pipeline_mode<synchronous>, transform_indices = @transform_12, window_bounds = array<i64: 128, 32>}, {pipeline_mode = #tpu.pipeline_mode<synchronous>, transform_indices = @transform_13, window_bounds = array<i64: 1, 32>}, {transform_indices = @transform_14, window_bounds = array<i64: 1, 8, 32>}]} {
    %c0 = arith.constant 0 : index
    %c0_0 = arith.constant 0 : index
    %c0_1 = arith.constant 0 : index
    %0 = vector.load %arg1[%c0, %c0_0, %c0_1] : memref<1x8x32xf32, #tpu.memory_space<vmem>>, vector<1x8x32xf32>
    %1 = vector.shape_cast %0 : vector<1x8x32xf32> to vector<8x32xf32>
    %c0_2 = arith.constant 0 : index
    %c0_3 = arith.constant 0 : index
    %c0_4 = arith.constant 0 : index
    %2 = vector.load %arg2[%c0_2, %c0_3, %c0_4] : memref<1x1x32xf32, #tpu.memory_space<vmem>>, vector<1x1x32xf32>
    %3 = vector.shape_cast %2 : vector<1x1x32xf32> to vector<1x32xf32>
    %4 = arith.negf %3 : vector<1x32xf32>
    %5 = math.exp %4 : vector<1x32xf32>
    %cst = arith.constant 1.000000e+00 : f32
    %6 = vector.broadcast %cst : f32 to vector<1x32xf32>
    %7 = arith.addf %6, %5 : vector<1x32xf32>
    %8 = arith.divf %6, %7 : vector<1x32xf32>
    %9 = arith.mulf %3, %8 : vector<1x32xf32>
    %c0_5 = arith.constant 0 : index
    %c0_6 = arith.constant 0 : index
    %10 = vector.load %arg3[%c0_5, %c0_6] : memref<32x64xf32, #tpu.memory_space<vmem>>, vector<32x64xf32>
    %cst_7 = arith.constant dense<0.000000e+00> : vector<1x64xf32>
    %11 = tpu.matmul %9, %10, %cst_7 {dimension_numbers = #tpu.dot_dimension_numbers<[1], [0], [0], [1], [0, 0, 1, 1], [], []>} : vector<1x32xf32>, vector<32x64xf32>, vector<1x64xf32> -> vector<1x64xf32>
    %c0_8 = arith.constant 0 : index
    %c0_9 = arith.constant 0 : index
    %12 = vector.load %arg4[%c0_8, %c0_9] : memref<1x64xf32, #tpu.memory_space<vmem>>, vector<1x64xf32>
    %13 = arith.addf %11, %12 : vector<1x64xf32>
    %14 = vector.extract_strided_slice %13 {offsets = [0, 0], sizes = [1, 32], strides = [1, 1]} : vector<1x64xf32> to vector<1x32xf32>
    %15 = vector.extract_strided_slice %13 {offsets = [0, 32], sizes = [1, 32], strides = [1, 1]} : vector<1x64xf32> to vector<1x32xf32>
    %cst_10 = arith.constant dense<0.000000e+00> : vector<8xf32>
    %16 = vector.multi_reduction <add>, %1, %cst_10 [1] : vector<8x32xf32> to vector<8xf32>
    %17 = vector.shape_cast %16 : vector<8xf32> to vector<8x1xf32>
    %cst_11 = arith.constant 3.200000e+01 : f32
    %18 = vector.broadcast %cst_11 : f32 to vector<8x1xf32>
    %19 = arith.divf %17, %18 : vector<8x1xf32>
    %20 = vector.broadcast %19 : vector<8x1xf32> to vector<8x32xf32>
    %21 = arith.subf %1, %20 : vector<8x32xf32>
    %22 = vector.broadcast %19 : vector<8x1xf32> to vector<8x32xf32>
    %23 = arith.subf %1, %22 : vector<8x32xf32>
    %24 = arith.mulf %21, %23 : vector<8x32xf32>
    %cst_12 = arith.constant dense<0.000000e+00> : vector<8xf32>
    %25 = vector.multi_reduction <add>, %24, %cst_12 [1] : vector<8x32xf32> to vector<8xf32>
    %26 = vector.shape_cast %25 : vector<8xf32> to vector<8x1xf32>
    %cst_13 = arith.constant 3.200000e+01 : f32
    %27 = vector.broadcast %cst_13 : f32 to vector<8x1xf32>
    %28 = arith.divf %26, %27 : vector<8x1xf32>
    %29 = vector.broadcast %19 : vector<8x1xf32> to vector<8x32xf32>
    %30 = arith.subf %1, %29 : vector<8x32xf32>
    %cst_14 = arith.constant 9.99999974E-6 : f32
    %31 = vector.broadcast %cst_14 : f32 to vector<8x1xf32>
    %32 = arith.addf %28, %31 : vector<8x1xf32>
    %33 = math.rsqrt %32 : vector<8x1xf32>
    %34 = vector.broadcast %33 : vector<8x1xf32> to vector<8x32xf32>
    %35 = arith.mulf %30, %34 : vector<8x32xf32>
    %cst_15 = arith.constant 1.000000e+00 : f32
    %36 = vector.broadcast %cst_15 : f32 to vector<1x32xf32>
    %37 = arith.addf %36, %14 : vector<1x32xf32>
    %38 = vector.broadcast %37 : vector<1x32xf32> to vector<8x32xf32>
    %39 = arith.mulf %35, %38 : vector<8x32xf32>
    %40 = vector.broadcast %15 : vector<1x32xf32> to vector<8x32xf32>
    %41 = arith.addf %39, %40 : vector<8x32xf32>
    %c0_16 = arith.constant 0 : index
    %c0_17 = arith.constant 0 : index
    %42 = vector.load %arg5[%c0_16, %c0_17] : memref<32x96xf32, #tpu.memory_space<vmem>>, vector<32x96xf32>
    %cst_18 = arith.constant dense<0.000000e+00> : vector<8x96xf32>
    %43 = tpu.matmul %41, %42, %cst_18 {dimension_numbers = #tpu.dot_dimension_numbers<[1], [0], [0], [1], [0, 0, 1, 1], [], []>} : vector<8x32xf32>, vector<32x96xf32>, vector<8x96xf32> -> vector<8x96xf32>
    %c0_19 = arith.constant 0 : index
    %c0_20 = arith.constant 0 : index
    %44 = vector.load %arg6[%c0_19, %c0_20] : memref<1x96xf32, #tpu.memory_space<vmem>>, vector<1x96xf32>
    %45 = vector.broadcast %44 : vector<1x96xf32> to vector<8x96xf32>
    %46 = arith.addf %43, %45 : vector<8x96xf32>
    %47 = vector.extract_strided_slice %46 {offsets = [0, 0], sizes = [8, 32], strides = [1, 1]} : vector<8x96xf32> to vector<8x32xf32>
    %48 = vector.extract_strided_slice %46 {offsets = [0, 32], sizes = [8, 32], strides = [1, 1]} : vector<8x96xf32> to vector<8x32xf32>
    %49 = vector.extract_strided_slice %46 {offsets = [0, 64], sizes = [8, 32], strides = [1, 1]} : vector<8x96xf32> to vector<8x32xf32>
    %cst_21 = arith.constant 0.000000e+00 : f32
    %50 = vector.broadcast %cst_21 : f32 to vector<8x32xf32>
    %51 = vector.extract_strided_slice %47 {offsets = [0, 0], sizes = [8, 8], strides = [1, 1]} : vector<8x32xf32> to vector<8x8xf32>
    %52 = vector.extract_strided_slice %48 {offsets = [0, 0], sizes = [8, 8], strides = [1, 1]} : vector<8x32xf32> to vector<8x8xf32>
    %53 = vector.extract_strided_slice %49 {offsets = [0, 0], sizes = [8, 8], strides = [1, 1]} : vector<8x32xf32> to vector<8x8xf32>
    %cst_22 = arith.constant dense<0.000000e+00> : vector<8x8xf32>
    %54 = tpu.matmul %51, %52, %cst_22 {dimension_numbers = #tpu.dot_dimension_numbers<[1], [1], [0], [0], [0, 0, 1, 0], [], []>} : vector<8x8xf32>, vector<8x8xf32>, vector<8x8xf32> -> vector<8x8xf32>
    %cst_23 = arith.constant 0.353553385 : f32
    %55 = vector.broadcast %cst_23 : f32 to vector<8x8xf32>
    %56 = arith.mulf %54, %55 : vector<8x8xf32>
    %cst_24 = arith.constant dense<0xFF800000> : vector<8xf32>
    %57 = vector.multi_reduction <maximumf>, %56, %cst_24 [1] : vector<8x8xf32> to vector<8xf32>
    %58 = vector.shape_cast %57 : vector<8xf32> to vector<8x1xf32>
    %59 = vector.broadcast %58 : vector<8x1xf32> to vector<8x8xf32>
    %60 = arith.subf %56, %59 : vector<8x8xf32>
    %61 = math.exp %60 : vector<8x8xf32>
    %cst_25 = arith.constant dense<0.000000e+00> : vector<8xf32>
    %62 = vector.multi_reduction <add>, %61, %cst_25 [1] : vector<8x8xf32> to vector<8xf32>
    %63 = vector.shape_cast %62 : vector<8xf32> to vector<8x1xf32>
    %64 = vector.broadcast %63 : vector<8x1xf32> to vector<8x8xf32>
    %65 = arith.divf %61, %64 : vector<8x8xf32>
    %cst_26 = arith.constant dense<0.000000e+00> : vector<8x8xf32>
    %66 = tpu.matmul %65, %53, %cst_26 {dimension_numbers = #tpu.dot_dimension_numbers<[1], [0], [0], [1], [0, 0, 1, 1], [], []>} : vector<8x8xf32>, vector<8x8xf32>, vector<8x8xf32> -> vector<8x8xf32>
    %c0_27 = arith.constant 0 : index
    %c0_28 = arith.constant 0 : index
    %67 = vector.load %arg7[%c0_27, %c0_28] : memref<32x32xf32, #tpu.memory_space<vmem>>, vector<8x32xf32>
    %cst_29 = arith.constant dense<0.000000e+00> : vector<8x32xf32>
    %68 = tpu.matmul %66, %67, %cst_29 {dimension_numbers = #tpu.dot_dimension_numbers<[1], [0], [0], [1], [0, 0, 1, 1], [], []>} : vector<8x8xf32>, vector<8x32xf32>, vector<8x32xf32> -> vector<8x32xf32>
    %69 = arith.addf %50, %68 : vector<8x32xf32>
    %70 = vector.extract_strided_slice %47 {offsets = [0, 8], sizes = [8, 8], strides = [1, 1]} : vector<8x32xf32> to vector<8x8xf32>
    %71 = vector.extract_strided_slice %48 {offsets = [0, 8], sizes = [8, 8], strides = [1, 1]} : vector<8x32xf32> to vector<8x8xf32>
    %72 = vector.extract_strided_slice %49 {offsets = [0, 8], sizes = [8, 8], strides = [1, 1]} : vector<8x32xf32> to vector<8x8xf32>
    %cst_30 = arith.constant dense<0.000000e+00> : vector<8x8xf32>
    %73 = tpu.matmul %70, %71, %cst_30 {dimension_numbers = #tpu.dot_dimension_numbers<[1], [1], [0], [0], [0, 0, 1, 0], [], []>} : vector<8x8xf32>, vector<8x8xf32>, vector<8x8xf32> -> vector<8x8xf32>
    %cst_31 = arith.constant 0.353553385 : f32
    %74 = vector.broadcast %cst_31 : f32 to vector<8x8xf32>
    %75 = arith.mulf %73, %74 : vector<8x8xf32>
    %cst_32 = arith.constant dense<0xFF800000> : vector<8xf32>
    %76 = vector.multi_reduction <maximumf>, %75, %cst_32 [1] : vector<8x8xf32> to vector<8xf32>
    %77 = vector.shape_cast %76 : vector<8xf32> to vector<8x1xf32>
    %78 = vector.broadcast %77 : vector<8x1xf32> to vector<8x8xf32>
    %79 = arith.subf %75, %78 : vector<8x8xf32>
    %80 = math.exp %79 : vector<8x8xf32>
    %cst_33 = arith.constant dense<0.000000e+00> : vector<8xf32>
    %81 = vector.multi_reduction <add>, %80, %cst_33 [1] : vector<8x8xf32> to vector<8xf32>
    %82 = vector.shape_cast %81 : vector<8xf32> to vector<8x1xf32>
    %83 = vector.broadcast %82 : vector<8x1xf32> to vector<8x8xf32>
    %84 = arith.divf %80, %83 : vector<8x8xf32>
    %cst_34 = arith.constant dense<0.000000e+00> : vector<8x8xf32>
    %85 = tpu.matmul %84, %72, %cst_34 {dimension_numbers = #tpu.dot_dimension_numbers<[1], [0], [0], [1], [0, 0, 1, 1], [], []>} : vector<8x8xf32>, vector<8x8xf32>, vector<8x8xf32> -> vector<8x8xf32>
    %c8 = arith.constant 8 : index
    %c0_35 = arith.constant 0 : index
    %86 = vector.load %arg7[%c8, %c0_35] : memref<32x32xf32, #tpu.memory_space<vmem>>, vector<8x32xf32>
    %cst_36 = arith.constant dense<0.000000e+00> : vector<8x32xf32>
    %87 = tpu.matmul %85, %86, %cst_36 {dimension_numbers = #tpu.dot_dimension_numbers<[1], [0], [0], [1], [0, 0, 1, 1], [], []>} : vector<8x8xf32>, vector<8x32xf32>, vector<8x32xf32> -> vector<8x32xf32>
    %88 = arith.addf %69, %87 : vector<8x32xf32>
    %89 = vector.extract_strided_slice %47 {offsets = [0, 16], sizes = [8, 8], strides = [1, 1]} : vector<8x32xf32> to vector<8x8xf32>
    %90 = vector.extract_strided_slice %48 {offsets = [0, 16], sizes = [8, 8], strides = [1, 1]} : vector<8x32xf32> to vector<8x8xf32>
    %91 = vector.extract_strided_slice %49 {offsets = [0, 16], sizes = [8, 8], strides = [1, 1]} : vector<8x32xf32> to vector<8x8xf32>
    %cst_37 = arith.constant dense<0.000000e+00> : vector<8x8xf32>
    %92 = tpu.matmul %89, %90, %cst_37 {dimension_numbers = #tpu.dot_dimension_numbers<[1], [1], [0], [0], [0, 0, 1, 0], [], []>} : vector<8x8xf32>, vector<8x8xf32>, vector<8x8xf32> -> vector<8x8xf32>
    %cst_38 = arith.constant 0.353553385 : f32
    %93 = vector.broadcast %cst_38 : f32 to vector<8x8xf32>
    %94 = arith.mulf %92, %93 : vector<8x8xf32>
    %cst_39 = arith.constant dense<0xFF800000> : vector<8xf32>
    %95 = vector.multi_reduction <maximumf>, %94, %cst_39 [1] : vector<8x8xf32> to vector<8xf32>
    %96 = vector.shape_cast %95 : vector<8xf32> to vector<8x1xf32>
    %97 = vector.broadcast %96 : vector<8x1xf32> to vector<8x8xf32>
    %98 = arith.subf %94, %97 : vector<8x8xf32>
    %99 = math.exp %98 : vector<8x8xf32>
    %cst_40 = arith.constant dense<0.000000e+00> : vector<8xf32>
    %100 = vector.multi_reduction <add>, %99, %cst_40 [1] : vector<8x8xf32> to vector<8xf32>
    %101 = vector.shape_cast %100 : vector<8xf32> to vector<8x1xf32>
    %102 = vector.broadcast %101 : vector<8x1xf32> to vector<8x8xf32>
    %103 = arith.divf %99, %102 : vector<8x8xf32>
    %cst_41 = arith.constant dense<0.000000e+00> : vector<8x8xf32>
    %104 = tpu.matmul %103, %91, %cst_41 {dimension_numbers = #tpu.dot_dimension_numbers<[1], [0], [0], [1], [0, 0, 1, 1], [], []>} : vector<8x8xf32>, vector<8x8xf32>, vector<8x8xf32> -> vector<8x8xf32>
    %c16 = arith.constant 16 : index
    %c0_42 = arith.constant 0 : index
    %105 = vector.load %arg7[%c16, %c0_42] : memref<32x32xf32, #tpu.memory_space<vmem>>, vector<8x32xf32>
    %cst_43 = arith.constant dense<0.000000e+00> : vector<8x32xf32>
    %106 = tpu.matmul %104, %105, %cst_43 {dimension_numbers = #tpu.dot_dimension_numbers<[1], [0], [0], [1], [0, 0, 1, 1], [], []>} : vector<8x8xf32>, vector<8x32xf32>, vector<8x32xf32> -> vector<8x32xf32>
    %107 = arith.addf %88, %106 : vector<8x32xf32>
    %108 = vector.extract_strided_slice %47 {offsets = [0, 24], sizes = [8, 8], strides = [1, 1]} : vector<8x32xf32> to vector<8x8xf32>
    %109 = vector.extract_strided_slice %48 {offsets = [0, 24], sizes = [8, 8], strides = [1, 1]} : vector<8x32xf32> to vector<8x8xf32>
    %110 = vector.extract_strided_slice %49 {offsets = [0, 24], sizes = [8, 8], strides = [1, 1]} : vector<8x32xf32> to vector<8x8xf32>
    %cst_44 = arith.constant dense<0.000000e+00> : vector<8x8xf32>
    %111 = tpu.matmul %108, %109, %cst_44 {dimension_numbers = #tpu.dot_dimension_numbers<[1], [1], [0], [0], [0, 0, 1, 0], [], []>} : vector<8x8xf32>, vector<8x8xf32>, vector<8x8xf32> -> vector<8x8xf32>
    %cst_45 = arith.constant 0.353553385 : f32
    %112 = vector.broadcast %cst_45 : f32 to vector<8x8xf32>
    %113 = arith.mulf %111, %112 : vector<8x8xf32>
    %cst_46 = arith.constant dense<0xFF800000> : vector<8xf32>
    %114 = vector.multi_reduction <maximumf>, %113, %cst_46 [1] : vector<8x8xf32> to vector<8xf32>
    %115 = vector.shape_cast %114 : vector<8xf32> to vector<8x1xf32>
    %116 = vector.broadcast %115 : vector<8x1xf32> to vector<8x8xf32>
    %117 = arith.subf %113, %116 : vector<8x8xf32>
    %118 = math.exp %117 : vector<8x8xf32>
    %cst_47 = arith.constant dense<0.000000e+00> : vector<8xf32>
    %119 = vector.multi_reduction <add>, %118, %cst_47 [1] : vector<8x8xf32> to vector<8xf32>
    %120 = vector.shape_cast %119 : vector<8xf32> to vector<8x1xf32>
    %121 = vector.broadcast %120 : vector<8x1xf32> to vector<8x8xf32>
    %122 = arith.divf %118, %121 : vector<8x8xf32>
    %cst_48 = arith.constant dense<0.000000e+00> : vector<8x8xf32>
    %123 = tpu.matmul %122, %110, %cst_48 {dimension_numbers = #tpu.dot_dimension_numbers<[1], [0], [0], [1], [0, 0, 1, 1], [], []>} : vector<8x8xf32>, vector<8x8xf32>, vector<8x8xf32> -> vector<8x8xf32>
    %c24 = arith.constant 24 : index
    %c0_49 = arith.constant 0 : index
    %124 = vector.load %arg7[%c24, %c0_49] : memref<32x32xf32, #tpu.memory_space<vmem>>, vector<8x32xf32>
    %cst_50 = arith.constant dense<0.000000e+00> : vector<8x32xf32>
    %125 = tpu.matmul %123, %124, %cst_50 {dimension_numbers = #tpu.dot_dimension_numbers<[1], [0], [0], [1], [0, 0, 1, 1], [], []>} : vector<8x8xf32>, vector<8x32xf32>, vector<8x32xf32> -> vector<8x32xf32>
    %126 = arith.addf %107, %125 : vector<8x32xf32>
    %127 = arith.addf %1, %126 : vector<8x32xf32>
    %c0_51 = arith.constant 0 : index
    %c0_52 = arith.constant 0 : index
    %128 = vector.load %arg8[%c0_51, %c0_52] : memref<1x32xf32, #tpu.memory_space<vmem>>, vector<1x32xf32>
    %129 = vector.broadcast %128 : vector<1x32xf32> to vector<8x32xf32>
    %130 = arith.addf %127, %129 : vector<8x32xf32>
    %c0_53 = arith.constant 0 : index
    %c0_54 = arith.constant 0 : index
    %131 = vector.load %arg9[%c0_53, %c0_54] : memref<32x64xf32, #tpu.memory_space<vmem>>, vector<32x64xf32>
    %cst_55 = arith.constant dense<0.000000e+00> : vector<1x64xf32>
    %132 = tpu.matmul %9, %131, %cst_55 {dimension_numbers = #tpu.dot_dimension_numbers<[1], [0], [0], [1], [0, 0, 1, 1], [], []>} : vector<1x32xf32>, vector<32x64xf32>, vector<1x64xf32> -> vector<1x64xf32>
    %c0_56 = arith.constant 0 : index
    %c0_57 = arith.constant 0 : index
    %133 = vector.load %arg10[%c0_56, %c0_57] : memref<1x64xf32, #tpu.memory_space<vmem>>, vector<1x64xf32>
    %134 = arith.addf %132, %133 : vector<1x64xf32>
    %135 = vector.extract_strided_slice %134 {offsets = [0, 0], sizes = [1, 32], strides = [1, 1]} : vector<1x64xf32> to vector<1x32xf32>
    %136 = vector.extract_strided_slice %134 {offsets = [0, 32], sizes = [1, 32], strides = [1, 1]} : vector<1x64xf32> to vector<1x32xf32>
    %cst_58 = arith.constant dense<0.000000e+00> : vector<8xf32>
    %137 = vector.multi_reduction <add>, %130, %cst_58 [1] : vector<8x32xf32> to vector<8xf32>
    %138 = vector.shape_cast %137 : vector<8xf32> to vector<8x1xf32>
    %cst_59 = arith.constant 3.200000e+01 : f32
    %139 = vector.broadcast %cst_59 : f32 to vector<8x1xf32>
    %140 = arith.divf %138, %139 : vector<8x1xf32>
    %141 = vector.broadcast %140 : vector<8x1xf32> to vector<8x32xf32>
    %142 = arith.subf %130, %141 : vector<8x32xf32>
    %143 = vector.broadcast %140 : vector<8x1xf32> to vector<8x32xf32>
    %144 = arith.subf %130, %143 : vector<8x32xf32>
    %145 = arith.mulf %142, %144 : vector<8x32xf32>
    %cst_60 = arith.constant dense<0.000000e+00> : vector<8xf32>
    %146 = vector.multi_reduction <add>, %145, %cst_60 [1] : vector<8x32xf32> to vector<8xf32>
    %147 = vector.shape_cast %146 : vector<8xf32> to vector<8x1xf32>
    %cst_61 = arith.constant 3.200000e+01 : f32
    %148 = vector.broadcast %cst_61 : f32 to vector<8x1xf32>
    %149 = arith.divf %147, %148 : vector<8x1xf32>
    %150 = vector.broadcast %140 : vector<8x1xf32> to vector<8x32xf32>
    %151 = arith.subf %130, %150 : vector<8x32xf32>
    %cst_62 = arith.constant 9.99999974E-6 : f32
    %152 = vector.broadcast %cst_62 : f32 to vector<8x1xf32>
    %153 = arith.addf %149, %152 : vector<8x1xf32>
    %154 = math.rsqrt %153 : vector<8x1xf32>
    %155 = vector.broadcast %154 : vector<8x1xf32> to vector<8x32xf32>
    %156 = arith.mulf %151, %155 : vector<8x32xf32>
    %cst_63 = arith.constant 1.000000e+00 : f32
    %157 = vector.broadcast %cst_63 : f32 to vector<1x32xf32>
    %158 = arith.addf %157, %135 : vector<1x32xf32>
    %159 = vector.broadcast %158 : vector<1x32xf32> to vector<8x32xf32>
    %160 = arith.mulf %156, %159 : vector<8x32xf32>
    %161 = vector.broadcast %136 : vector<1x32xf32> to vector<8x32xf32>
    %162 = arith.addf %160, %161 : vector<8x32xf32>
    %c0_64 = arith.constant 0 : index
    %c0_65 = arith.constant 0 : index
    %163 = vector.load %arg11[%c0_64, %c0_65] : memref<32x128xf32, #tpu.memory_space<vmem>>, vector<32x128xf32>
    %cst_66 = arith.constant dense<0.000000e+00> : vector<8x128xf32>
    %164 = tpu.matmul %162, %163, %cst_66 {dimension_numbers = #tpu.dot_dimension_numbers<[1], [0], [0], [1], [0, 0, 1, 1], [], []>} : vector<8x32xf32>, vector<32x128xf32>, vector<8x128xf32> -> vector<8x128xf32>
    %c0_67 = arith.constant 0 : index
    %c0_68 = arith.constant 0 : index
    %165 = vector.load %arg12[%c0_67, %c0_68] : memref<1x128xf32, #tpu.memory_space<vmem>>, vector<1x128xf32>
    %166 = vector.broadcast %165 : vector<1x128xf32> to vector<8x128xf32>
    %167 = arith.addf %164, %166 : vector<8x128xf32>
    %168 = arith.negf %167 : vector<8x128xf32>
    %169 = math.exp %168 : vector<8x128xf32>
    %cst_69 = arith.constant 1.000000e+00 : f32
    %170 = vector.broadcast %cst_69 : f32 to vector<8x128xf32>
    %171 = arith.addf %170, %169 : vector<8x128xf32>
    %172 = arith.divf %170, %171 : vector<8x128xf32>
    %173 = arith.mulf %167, %172 : vector<8x128xf32>
    %c0_70 = arith.constant 0 : index
    %c0_71 = arith.constant 0 : index
    %174 = vector.load %arg13[%c0_70, %c0_71] : memref<128x32xf32, #tpu.memory_space<vmem>>, vector<128x32xf32>
    %cst_72 = arith.constant dense<0.000000e+00> : vector<8x32xf32>
    %175 = tpu.matmul %173, %174, %cst_72 {dimension_numbers = #tpu.dot_dimension_numbers<[1], [0], [0], [1], [0, 0, 1, 1], [], []>} : vector<8x128xf32>, vector<128x32xf32>, vector<8x32xf32> -> vector<8x32xf32>
    %c0_73 = arith.constant 0 : index
    %c0_74 = arith.constant 0 : index
    %176 = vector.load %arg14[%c0_73, %c0_74] : memref<1x32xf32, #tpu.memory_space<vmem>>, vector<1x32xf32>
    %177 = vector.broadcast %176 : vector<1x32xf32> to vector<8x32xf32>
    %178 = arith.addf %175, %177 : vector<8x32xf32>
    %179 = arith.addf %130, %178 : vector<8x32xf32>
    %c0_75 = arith.constant 0 : index
    %c0_76 = arith.constant 0 : index
    %c0_77 = arith.constant 0 : index
    %180 = vector.load %arg15[%c0_75, %c0_76, %c0_77] : memref<1x8x32xf32, #tpu.memory_space<vmem>>, vector<1x8x32xf32>
    %181 = vector.shape_cast %180 : vector<1x8x32xf32> to vector<8x32xf32>
    %182 = vector.shape_cast %179 : vector<8x32xf32> to vector<1x8x32xf32>
    tpu.vector_store %arg15[%c0_75, %c0_76, %c0_77], %182 {strides = array<i32>} : memref<1x8x32xf32, #tpu.memory_space<vmem>>, vector<1x8x32xf32>,
    return
  }
  func.func @transform_0(%arg0: i32) -> (i32, i32, i32) {
    %c0_i32 = arith.constant 0 : i32
    %c0_i32_0 = arith.constant 0 : i32
    %c0_i32_1 = arith.constant 0 : i32
    return %arg0, %c0_i32, %c0_i32_0 : i32, i32, i32
  }
  func.func @transform_1(%arg0: i32) -> (i32, i32, i32) {
    %c0_i32 = arith.constant 0 : i32
    %c0_i32_0 = arith.constant 0 : i32
    %c0_i32_1 = arith.constant 0 : i32
    return %arg0, %c0_i32, %c0_i32_0 : i32, i32, i32
  }
  func.func @transform_2(%arg0: i32) -> (i32, i32) {
    %c0_i32 = arith.constant 0 : i32
    %c0_i32_0 = arith.constant 0 : i32
    %c0_i32_1 = arith.constant 0 : i32
    return %c0_i32, %c0_i32_0 : i32, i32
  }
  func.func @transform_3(%arg0: i32) -> (i32, i32) {
    %c0_i32 = arith.constant 0 : i32
    %c0_i32_0 = arith.constant 0 : i32
    %c0_i32_1 = arith.constant 0 : i32
    return %c0_i32, %c0_i32_0 : i32, i32
  }
  func.func @transform_4(%arg0: i32) -> (i32, i32) {
    %c0_i32 = arith.constant 0 : i32
    %c0_i32_0 = arith.constant 0 : i32
    %c0_i32_1 = arith.constant 0 : i32
    return %c0_i32, %c0_i32_0 : i32, i32
  }
  func.func @transform_5(%arg0: i32) -> (i32, i32) {
    %c0_i32 = arith.constant 0 : i32
    %c0_i32_0 = arith.constant 0 : i32
    %c0_i32_1 = arith.constant 0 : i32
    return %c0_i32, %c0_i32_0 : i32, i32
  }
  func.func @transform_6(%arg0: i32) -> (i32, i32) {
    %c0_i32 = arith.constant 0 : i32
    %c0_i32_0 = arith.constant 0 : i32
    %c0_i32_1 = arith.constant 0 : i32
    return %c0_i32, %c0_i32_0 : i32, i32
  }
  func.func @transform_7(%arg0: i32) -> (i32, i32) {
    %c0_i32 = arith.constant 0 : i32
    %c0_i32_0 = arith.constant 0 : i32
    %c0_i32_1 = arith.constant 0 : i32
    return %c0_i32, %c0_i32_0 : i32, i32
  }
  func.func @transform_8(%arg0: i32) -> (i32, i32) {
    %c0_i32 = arith.constant 0 : i32
    %c0_i32_0 = arith.constant 0 : i32
    %c0_i32_1 = arith.constant 0 : i32
    return %c0_i32, %c0_i32_0 : i32, i32
  }
  func.func @transform_9(%arg0: i32) -> (i32, i32) {
    %c0_i32 = arith.constant 0 : i32
    %c0_i32_0 = arith.constant 0 : i32
    %c0_i32_1 = arith.constant 0 : i32
    return %c0_i32, %c0_i32_0 : i32, i32
  }
  func.func @transform_10(%arg0: i32) -> (i32, i32) {
    %c0_i32 = arith.constant 0 : i32
    %c0_i32_0 = arith.constant 0 : i32
    %c0_i32_1 = arith.constant 0 : i32
    return %c0_i32, %c0_i32_0 : i32, i32
  }
  func.func @transform_11(%arg0: i32) -> (i32, i32) {
    %c0_i32 = arith.constant 0 : i32
    %c0_i32_0 = arith.constant 0 : i32
    %c0_i32_1 = arith.constant 0 : i32
    return %c0_i32, %c0_i32_0 : i32, i32
  }
  func.func @transform_12(%arg0: i32) -> (i32, i32) {
    %c0_i32 = arith.constant 0 : i32
    %c0_i32_0 = arith.constant 0 : i32
    %c0_i32_1 = arith.constant 0 : i32
    return %c0_i32, %c0_i32_0 : i32, i32
  }
  func.func @transform_13(%arg0: i32) -> (i32, i32) {
    %c0_i32 = arith.constant 0 : i32
    %c0_i32_0 = arith.constant 0 : i32
    %c0_i32_1 = arith.constant 0 : i32
    return %c0_i32, %c0_i32_0 : i32, i32
  }
  func.func @transform_14(%arg0: i32) -> (i32, i32, i32) {
    %c0_i32 = arith.constant 0 : i32
    %c0_i32_0 = arith.constant 0 : i32
    %c0_i32_1 = arith.constant 0 : i32
    return %arg0, %c0_i32, %c0_i32_0 : i32, i32, i32
  }
}

</mosaic_0001>

<llo_original>
// kernel: tpu_custom_call.1
$region0: #{tpu_custom_call.1}
  #allocation0 [shape = 'u32[]', space=smem, size = 0x4, offset = 0x4, fixed_abs, tag = 'smem constant byte address 0x4 - core index']
  #allocation1 [shape = 'u32[144,128]{1,0:T(1,128)}', space=vmem, size = 0x12000, scoped, tag = 'internal scratch']
  %s0 = inlined_call_operand.hbm [shape: f32[2,8,32], index: 0, kind: input, shape index: {}]
  %s1 = inlined_call_operand.hbm [shape: f32[2,1,32], index: 1, kind: input, shape index: {}]
  %s2 = inlined_call_operand.hbm [shape: f32[32,64], index: 2, kind: input, shape index: {}]
  %s3 = inlined_call_operand.hbm [shape: f32[1,64], index: 3, kind: input, shape index: {}]
  %s4 = inlined_call_operand.hbm [shape: f32[32,96], index: 4, kind: input, shape index: {}]
  %s5 = inlined_call_operand.hbm [shape: f32[1,96], index: 5, kind: input, shape index: {}]
  %s6 = inlined_call_operand.hbm [shape: f32[32,32], index: 6, kind: input, shape index: {}]
  %s7 = inlined_call_operand.hbm [shape: f32[1,32], index: 7, kind: input, shape index: {}]
  %s8 = inlined_call_operand.hbm [shape: f32[32,64], index: 8, kind: input, shape index: {}]
  %s9 = inlined_call_operand.hbm [shape: f32[1,64], index: 9, kind: input, shape index: {}]
  %s10 = inlined_call_operand.hbm [shape: f32[32,128], index: 10, kind: input, shape index: {}]
  %s11 = inlined_call_operand.hbm [shape: f32[1,128], index: 11, kind: input, shape index: {}]
  %s12 = inlined_call_operand.hbm [shape: f32[128,32], index: 12, kind: input, shape index: {}]
  %s13 = inlined_call_operand.hbm [shape: f32[1,32], index: 13, kind: input, shape index: {}]
  %s14 = inlined_call_operand.hbm [shape: f32[2,8,32], index: 14, kind: output, shape index: {}]
  %s15 = sld [smem:[#allocation0]]
  $region145: #{tpu_custom_call.1} parent=0
    _
  %s17 = ssub.s32 1, %s15
  %s18 = scalar_select 0, %s17, %s15
  $region1: #{tpu_custom_call.1} parent=0
    #allocation2 [shape = 'u8[8192]{0}', space=vmem, size = 0x2000, scoped, tag = 'input window, operand 0']
    #allocation3 [shape = 's32[2]{0}', space=sflag, size = 0x8, scoped, tag = 'scoped memory for tpu_custom_call.1']
    #allocation4 [shape = 's32[2]{0}', space=sflag, size = 0x8, scoped, tag = 'scoped memory for tpu_custom_call.1']
    #allocation5 [shape = 'u8[1024]{0}', space=vmem, size = 0x400, scoped, tag = 'input window, operand 1']
    #allocation6 [shape = 's32[2]{0}', space=sflag, size = 0x8, scoped, tag = 'scoped memory for tpu_custom_call.1']
    #allocation7 [shape = 'u8[16384]{0}', space=vmem, size = 0x4000, scoped, tag = 'input window, operand 2, single buffered']
    #allocation8 [shape = 'u8[512]{0}', space=vmem, size = 0x400, scoped, tag = 'input window, operand 3, single buffered']
    #allocation9 [shape = 's32[1]{0}', space=sflag, size = 0x4, scoped, tag = 'scoped memory for tpu_custom_call.1']
    #allocation10 [shape = 'u8[16384]{0}', space=vmem, size = 0x4000, scoped, tag = 'input window, operand 4, single buffered']
    #allocation11 [shape = 'u8[512]{0}', space=vmem, size = 0x400, scoped, tag = 'input window, operand 5, single buffered']
    #allocation12 [shape = 's32[1]{0}', space=sflag, size = 0x4, scoped, tag = 'scoped memory for tpu_custom_call.1']
    #allocation13 [shape = 'u8[16384]{0}', space=vmem, size = 0x4000, scoped, tag = 'input window, operand 6, single buffered']
    #allocation14 [shape = 'u8[512]{0}', space=vmem, size = 0x400, scoped, tag = 'input window, operand 7, single buffered']
    #allocation15 [shape = 's32[1]{0}', space=sflag, size = 0x4, scoped, tag = 'scoped memory for tpu_custom_call.1']
    #allocation16 [shape = 'u8[16384]{0}', space=vmem, size = 0x4000, scoped, tag = 'input window, operand 8, single buffered']
    #allocation17 [shape = 'u8[512]{0}', space=vmem, size = 0x400, scoped, tag = 'input window, operand 9, single buffered']
    #allocation18 [shape = 's32[1]{0}', space=sflag, size = 0x4, scoped, tag = 'scoped memory for tpu_custom_call.1']
    #allocation19 [shape = 'u8[16384]{0}', space=vmem, size = 0x4000, scoped, tag = 'input window, operand 10, single buffered']
    #allocation20 [shape = 'u8[512]{0}', space=vmem, size = 0x400, scoped, tag = 'input window, operand 11, single buffered']
    #allocation21 [shape = 's32[1]{0}', space=sflag, size = 0x4, scoped, tag = 'scoped memory for tpu_custom_call.1']
    #allocation22 [shape = 'u8[65536]{0}', space=vmem, size = 0x10000, scoped, tag = 'input window, operand 12, single buffered']
    #allocation23 [shape = 'u8[512]{0}', space=vmem, size = 0x400, scoped, tag = 'input window, operand 13, single buffered']
    #allocation24 [shape = 's32[1]{0}', space=sflag, size = 0x4, scoped, tag = 'scoped memory for tpu_custom_call.1']
    #allocation25 [shape = 'u8[8192]{0}', space=vmem, size = 0x2000, scoped, tag = 'output window, operand 0']
    %19 = vsyncpa [#allocation3], 0
    %s20 = scalar_lea.sflag [#allocation3], 1
    %21 = vsyncpa %s20, 0
    %22 = vsyncpa [#allocation6], 0
    %s23 = scalar_lea.sflag [#allocation6], 1
    %24 = vsyncpa %s23, 0
    %25 = vsyncpa [#allocation9], 0
    %26 = vsyncpa [#allocation12], 0
    %27 = vsyncpa [#allocation15], 0
    %28 = vsyncpa [#allocation18], 0
    %29 = vsyncpa [#allocation21], 0
    %30 = vsyncpa [#allocation24], 0
    %31 = vsyncpa [#allocation4], 0
    %s32 = scalar_lea.sflag [#allocation4], 1
    %33 = vsyncpa %s32, 0
    loop: start=0, step=1, limit=4
    $region2: #{tpu_custom_call.1} parent=1 // loop_pre_header
      _
    $region3: #{tpu_custom_call.1} parent=1 // loop_header
      %s35 = sphi 0, %s39
      %p36 = scmp.ge.s32.totalorder %s35, 4
      %s45 = sphi 0, %s47
      %s48 = sphi 0, %s45
      %s49 = sphi 0, %s48
      %s65 = sphi 0, %s49
      %s71 = sphi 0, %s73
      %s74 = sphi 0, %s71
      %s75 = sphi 0, %s74
      %s91 = sphi 0, %s75
      %s95 = sphi 0, %s95
      %s97 = sphi 0, %s95
      %s98 = sphi 0, %s97
      %s112 = sphi 0, %s98
      %s116 = sphi 0, %s116
      %s118 = sphi 0, %s116
      %s119 = sphi 0, %s118
      %s133 = sphi 0, %s119
      %s137 = sphi 0, %s137
      %s139 = sphi 0, %s137
      %s140 = sphi 0, %s139
      %s154 = sphi 0, %s140
      %s158 = sphi 0, %s158
      %s160 = sphi 0, %s158
      %s161 = sphi 0, %s160
      %s175 = sphi 0, %s161
      %s179 = sphi 0, %s179
      %s181 = sphi 0, %s179
      %s182 = sphi 0, %s181
      %s196 = sphi 0, %s182
      %s200 = sphi 0, %s200
      %s202 = sphi 0, %s200
      %s203 = sphi 0, %s202
      %s217 = sphi 0, %s203
      %s221 = sphi 0, %s221
      %s223 = sphi 0, %s221
      %s224 = sphi 0, %s223
      %s238 = sphi 0, %s224
      %s242 = sphi 0, %s242
      %s244 = sphi 0, %s242
      %s245 = sphi 0, %s244
      %s259 = sphi 0, %s245
      %s263 = sphi 0, %s263
      %s265 = sphi 0, %s263
      %s266 = sphi 0, %s265
      %s280 = sphi 0, %s266
      %s284 = sphi 0, %s284
      %s286 = sphi 0, %s284
      %s287 = sphi 0, %s286
      %s301 = sphi 0, %s287
      %s305 = sphi 0, %s305
      %s307 = sphi 0, %s305
      %s308 = sphi 0, %s307
      %s322 = sphi 0, %s308
      %s326 = sphi 0, %s326
      %s328 = sphi 0, %s326
      %s329 = sphi 0, %s328
      %s343 = sphi 0, %s329
      %s349 = sphi 0, %s351
      %s352 = sphi 0, %s349
      %s353 = sphi 0, %s352
      %s369 = sphi 0, %s353
    $region4: #{tpu_custom_call.1} parent=1 // loop_header_branch
      %38 = sbr.rel (%p36) target = $region8
    $region5: #{tpu_custom_call.1} parent=1 // loop_body
      %s40 = ssub.s32 %s35, 1
      %s41 = ssub.s32 %s35, 2
      %s42 = sadd.s32 %s35, 1
      %s43 = ssub.s32 %s35, %s42
      %p44 = scmp.eq.s32.totalorder %s43, 0
      %s46 = sadd.s32 %s45, 1
      %s47 = scalar_select %p44, %s45, %s46
      %p50 = pneg %p44
      %p51 = scmp.eq.s32.totalorder %s35, 1
      %p52 = por %p50, %p51
      %p53 = scmp.ne.s32.totalorder %s45, %s48
      %p54 = scmp.eq.s32.totalorder %s35, 0
      %p55 = por %p53, %p54
      %p56 = scmp.ne.s32.totalorder %s45, %s48
      %p57 = scmp.eq.s32.totalorder %s40, 1
      %p58 = por %p56, %p57
      %p59 = scmp.ne.s32.totalorder %s48, %s49
      %p60 = scmp.eq.s32.totalorder %s40, 0
      %p61 = por %p59, %p60
      %p62 = scmp.ne.s32.totalorder %s48, %s49
      %p63 = scmp.eq.s32.totalorder %s41, 1
      %p64 = por %p62, %p63
      %p66 = scmp.ne.s32.totalorder %s49, %s65
      %p67 = scmp.eq.s32.totalorder %s41, 0
      %p68 = por %p66, %p67
      %s69 = ssub.s32 %s35, %s42
      %p70 = scmp.eq.s32.totalorder %s69, 0
      %s72 = sadd.s32 %s71, 1
      %s73 = scalar_select %p70, %s71, %s72
      %p76 = pneg %p70
      %p77 = scmp.eq.s32.totalorder %s35, 1
      %p78 = por %p76, %p77
      %p79 = scmp.ne.s32.totalorder %s71, %s74
      %p80 = scmp.eq.s32.totalorder %s35, 0
      %p81 = por %p79, %p80
      %p82 = scmp.ne.s32.totalorder %s71, %s74
      %p83 = scmp.eq.s32.totalorder %s40, 1
      %p84 = por %p82, %p83
      %p85 = scmp.ne.s32.totalorder %s74, %s75
      %p86 = scmp.eq.s32.totalorder %s40, 0
      %p87 = por %p85, %p86
      %p88 = scmp.ne.s32.totalorder %s74, %s75
      %p89 = scmp.eq.s32.totalorder %s41, 1
      %p90 = por %p88, %p89
      %p92 = scmp.ne.s32.totalorder %s75, %s91
      %p93 = scmp.eq.s32.totalorder %s41, 0
      %p94 = por %p92, %p93
      %s96 = sadd.s32 %s95, 1
      %p99 = scmp.eq.s32.totalorder %s35, 1
      %p100 = scmp.ne.s32.totalorder %s95, %s97
      %p101 = scmp.eq.s32.totalorder %s35, 0
      %p102 = por %p100, %p101
      %p103 = scmp.ne.s32.totalorder %s95, %s97
      %p104 = scmp.eq.s32.totalorder %s40, 1
      %p105 = por %p103, %p104
      %p106 = scmp.ne.s32.totalorder %s97, %s98
      %p107 = scmp.eq.s32.totalorder %s40, 0
      %p108 = por %p106, %p107
      %p109 = scmp.ne.s32.totalorder %s97, %s98
      %p110 = scmp.eq.s32.totalorder %s41, 1
      %p111 = por %p109, %p110
      %p113 = scmp.ne.s32.totalorder %s98, %s112
      %p114 = scmp.eq.s32.totalorder %s41, 0
      %p115 = por %p113, %p114
      %s117 = sadd.s32 %s116, 1
      %p120 = scmp.eq.s32.totalorder %s35, 1
      %p121 = scmp.ne.s32.totalorder %s116, %s118
      %p122 = scmp.eq.s32.totalorder %s35, 0
      %p123 = por %p121, %p122
      %p124 = scmp.ne.s32.totalorder %s116, %s118
      %p125 = scmp.eq.s32.totalorder %s40, 1
      %p126 = por %p124, %p125
      %p127 = scmp.ne.s32.totalorder %s118, %s119
      %p128 = scmp.eq.s32.totalorder %s40, 0
      %p129 = por %p127, %p128
      %p130 = scmp.ne.s32.totalorder %s118, %s119
      %p131 = scmp.eq.s32.totalorder %s41, 1
      %p132 = por %p130, %p131
      %p134 = scmp.ne.s32.totalorder %s119, %s133
      %p135 = scmp.eq.s32.totalorder %s41, 0
      %p136 = por %p134, %p135
      %s138 = sadd.s32 %s137, 1
      %p141 = scmp.eq.s32.totalorder %s35, 1
      %p142 = scmp.ne.s32.totalorder %s137, %s139
      %p143 = scmp.eq.s32.totalorder %s35, 0
      %p144 = por %p142, %p143
      %p145 = scmp.ne.s32.totalorder %s137, %s139
      %p146 = scmp.eq.s32.totalorder %s40, 1
      %p147 = por %p145, %p146
      %p148 = scmp.ne.s32.totalorder %s139, %s140
      %p149 = scmp.eq.s32.totalorder %s40, 0
      %p150 = por %p148, %p149
      %p151 = scmp.ne.s32.totalorder %s139, %s140
      %p152 = scmp.eq.s32.totalorder %s41, 1
      %p153 = por %p151, %p152
      %p155 = scmp.ne.s32.totalorder %s140, %s154
      %p156 = scmp.eq.s32.totalorder %s41, 0
      %p157 = por %p155, %p156
      %s159 = sadd.s32 %s158, 1
      %p162 = scmp.eq.s32.totalorder %s35, 1
      %p163 = scmp.ne.s32.totalorder %s158, %s160
      %p164 = scmp.eq.s32.totalorder %s35, 0
      %p165 = por %p163, %p164
      %p166 = scmp.ne.s32.totalorder %s158, %s160
      %p167 = scmp.eq.s32.totalorder %s40, 1
      %p168 = por %p166, %p167
      %p169 = scmp.ne.s32.totalorder %s160, %s161
      %p170 = scmp.eq.s32.totalorder %s40, 0
      %p171 = por %p169, %p170
      %p172 = scmp.ne.s32.totalorder %s160, %s161
      %p173 = scmp.eq.s32.totalorder %s41, 1
      %p174 = por %p172, %p173
      %p176 = scmp.ne.s32.totalorder %s161, %s175
      %p177 = scmp.eq.s32.totalorder %s41, 0
      %p178 = por %p176, %p177
      %s180 = sadd.s32 %s179, 1
      %p183 = scmp.eq.s32.totalorder %s35, 1
      %p184 = scmp.ne.s32.totalorder %s179, %s181
      %p185 = scmp.eq.s32.totalorder %s35, 0
      %p186 = por %p184, %p185
      %p187 = scmp.ne.s32.totalorder %s179, %s181
      %p188 = scmp.eq.s32.totalorder %s40, 1
      %p189 = por %p187, %p188
      %p190 = scmp.ne.s32.totalorder %s181, %s182
      %p191 = scmp.eq.s32.totalorder %s40, 0
      %p192 = por %p190, %p191
      %p193 = scmp.ne.s32.totalorder %s181, %s182
      %p194 = scmp.eq.s32.totalorder %s41, 1
      %p195 = por %p193, %p194
      %p197 = scmp.ne.s32.totalorder %s182, %s196
      %p198 = scmp.eq.s32.totalorder %s41, 0
      %p199 = por %p197, %p198
      %s201 = sadd.s32 %s200, 1
      %p204 = scmp.eq.s32.totalorder %s35, 1
      %p205 = scmp.ne.s32.totalorder %s200, %s202
      %p206 = scmp.eq.s32.totalorder %s35, 0
      %p207 = por %p205, %p206
      %p208 = scmp.ne.s32.totalorder %s200, %s202
      %p209 = scmp.eq.s32.totalorder %s40, 1
      %p210 = por %p208, %p209
      %p211 = scmp.ne.s32.totalorder %s202, %s203
      %p212 = scmp.eq.s32.totalorder %s40, 0
      %p213 = por %p211, %p212
      %p214 = scmp.ne.s32.totalorder %s202, %s203
      %p215 = scmp.eq.s32.totalorder %s41, 1
      %p216 = por %p214, %p215
      %p218 = scmp.ne.s32.totalorder %s203, %s217
      %p219 = scmp.eq.s32.totalorder %s41, 0
      %p220 = por %p218, %p219
      %s222 = sadd.s32 %s221, 1
      %p225 = scmp.eq.s32.totalorder %s35, 1
      %p226 = scmp.ne.s32.totalorder %s221, %s223
      %p227 = scmp.eq.s32.totalorder %s35, 0
      %p228 = por %p226, %p227
      %p229 = scmp.ne.s32.totalorder %s221, %s223
      %p230 = scmp.eq.s32.totalorder %s40, 1
      %p231 = por %p229, %p230
      %p232 = scmp.ne.s32.totalorder %s223, %s224
      %p233 = scmp.eq.s32.totalorder %s40, 0
      %p234 = por %p232, %p233
      %p235 = scmp.ne.s32.totalorder %s223, %s224
      %p236 = scmp.eq.s32.totalorder %s41, 1
      %p237 = por %p235, %p236
      %p239 = scmp.ne.s32.totalorder %s224, %s238
      %p240 = scmp.eq.s32.totalorder %s41, 0
      %p241 = por %p239, %p240
      %s243 = sadd.s32 %s242, 1
      %p246 = scmp.eq.s32.totalorder %s35, 1
      %p247 = scmp.ne.s32.totalorder %s242, %s244
      %p248 = scmp.eq.s32.totalorder %s35, 0
      %p249 = por %p247, %p248
      %p250 = scmp.ne.s32.totalorder %s242, %s244
      %p251 = scmp.eq.s32.totalorder %s40, 1
      %p252 = por %p250, %p251
      %p253 = scmp.ne.s32.totalorder %s244, %s245
      %p254 = scmp.eq.s32.totalorder %s40, 0
      %p255 = por %p253, %p254
      %p256 = scmp.ne.s32.totalorder %s244, %s245
      %p257 = scmp.eq.s32.totalorder %s41, 1
      %p258 = por %p256, %p257
      %p260 = scmp.ne.s32.totalorder %s245, %s259
      %p261 = scmp.eq.s32.totalorder %s41, 0
      %p262 = por %p260, %p261
      %s264 = sadd.s32 %s263, 1
      %p267 = scmp.eq.s32.totalorder %s35, 1
      %p268 = scmp.ne.s32.totalorder %s263, %s265
      %p269 = scmp.eq.s32.totalorder %s35, 0
      %p270 = por %p268, %p269
      %p271 = scmp.ne.s32.totalorder %s263, %s265
      %p272 = scmp.eq.s32.totalorder %s40, 1
      %p273 = por %p271, %p272
      %p274 = scmp.ne.s32.totalorder %s265, %s266
      %p275 = scmp.eq.s32.totalorder %s40, 0
      %p276 = por %p274, %p275
      %p277 = scmp.ne.s32.totalorder %s265, %s266
      %p278 = scmp.eq.s32.totalorder %s41, 1
      %p279 = por %p277, %p278
      %p281 = scmp.ne.s32.totalorder %s266, %s280
      %p282 = scmp.eq.s32.totalorder %s41, 0
      %p283 = por %p281, %p282
      %s285 = sadd.s32 %s284, 1
      %p288 = scmp.eq.s32.totalorder %s35, 1
      %p289 = scmp.ne.s32.totalorder %s284, %s286
      %p290 = scmp.eq.s32.totalorder %s35, 0
      %p291 = por %p289, %p290
      %p292 = scmp.ne.s32.totalorder %s284, %s286
      %p293 = scmp.eq.s32.totalorder %s40, 1
      %p294 = por %p292, %p293
      %p295 = scmp.ne.s32.totalorder %s286, %s287
      %p296 = scmp.eq.s32.totalorder %s40, 0
      %p297 = por %p295, %p296
      %p298 = scmp.ne.s32.totalorder %s286, %s287
      %p299 = scmp.eq.s32.totalorder %s41, 1
      %p300 = por %p298, %p299
      %p302 = scmp.ne.s32.totalorder %s287, %s301
      %p303 = scmp.eq.s32.totalorder %s41, 0
      %p304 = por %p302, %p303
      %s306 = sadd.s32 %s305, 1
      %p309 = scmp.eq.s32.totalorder %s35, 1
      %p310 = scmp.ne.s32.totalorder %s305, %s307
      %p311 = scmp.eq.s32.totalorder %s35, 0
      %p312 = por %p310, %p311
      %p313 = scmp.ne.s32.totalorder %s305, %s307
      %p314 = scmp.eq.s32.totalorder %s40, 1
      %p315 = por %p313, %p314
      %p316 = scmp.ne.s32.totalorder %s307, %s308
      %p317 = scmp.eq.s32.totalorder %s40, 0
      %p318 = por %p316, %p317
      %p319 = scmp.ne.s32.totalorder %s307, %s308
      %p320 = scmp.eq.s32.totalorder %s41, 1
      %p321 = por %p319, %p320
      %p323 = scmp.ne.s32.totalorder %s308, %s322
      %p324 = scmp.eq.s32.totalorder %s41, 0
      %p325 = por %p323, %p324
      %s327 = sadd.s32 %s326, 1
      %p330 = scmp.eq.s32.totalorder %s35, 1
      %p331 = scmp.ne.s32.totalorder %s326, %s328
      %p332 = scmp.eq.s32.totalorder %s35, 0
      %p333 = por %p331, %p332
      %p334 = scmp.ne.s32.totalorder %s326, %s328
      %p335 = scmp.eq.s32.totalorder %s40, 1
      %p336 = por %p334, %p335
      %p337 = scmp.ne.s32.totalorder %s328, %s329
      %p338 = scmp.eq.s32.totalorder %s40, 0
      %p339 = por %p337, %p338
      %p340 = scmp.ne.s32.totalorder %s328, %s329
      %p341 = scmp.eq.s32.totalorder %s41, 1
      %p342 = por %p340, %p341
      %p344 = scmp.ne.s32.totalorder %s329, %s343
      %p345 = scmp.eq.s32.totalorder %s41, 0
      %p346 = por %p344, %p345
      %s347 = ssub.s32 %s35, %s42
      %p348 = scmp.eq.s32.totalorder %s347, 0
      %s350 = sadd.s32 %s349, 1
      %s351 = scalar_select %p348, %s349, %s350
      %p354 = pneg %p348
      %p355 = scmp.eq.s32.totalorder %s35, 1
      %p356 = por %p354, %p355
      %p357 = scmp.ne.s32.totalorder %s349, %s352
      %p358 = scmp.eq.s32.totalorder %s35, 0
      %p359 = por %p357, %p358
      %p360 = scmp.ne.s32.totalorder %s349, %s352
      %p361 = scmp.eq.s32.totalorder %s40, 1
      %p362 = por %p360, %p361
      %p363 = scmp.ne.s32.totalorder %s352, %s353
      %p364 = scmp.eq.s32.totalorder %s40, 0
      %p365 = por %p363, %p364
      %p366 = scmp.ne.s32.totalorder %s352, %s353
      %p367 = scmp.eq.s32.totalorder %s41, 1
      %p368 = por %p366, %p367
      %p370 = scmp.ne.s32.totalorder %s353, %s369
      %p371 = scmp.eq.s32.totalorder %s41, 0
      %p372 = por %p370, %p371
      %p373 = scmp.le.s32.totalorder 1, %s35
      %p374 = scmp.lt.s32.totalorder %s35, 3
      %p375 = pnand %p373, %p374
      %p376 = pneg %p375
      // Predicated region
      $region9: #{tpu_custom_call.1} parent=5 // pred_check
        _
      $region10: #{tpu_custom_call.1} parent=5 // pred_check_branch
        %378 = sbr.rel (%p375) target = $region12
      $region11: #{tpu_custom_call.1} parent=5 // pred_region
        %s379 = ssub.s32 %s35, 1
        // Predicated region
        $region13: #{tpu_custom_call.1} parent=11 // pred_check
          %p380 = pneg %p108
        $region14: #{tpu_custom_call.1} parent=11 // pred_check_branch
          %382 = sbr.rel (%p380) target = $region16
        $region15: #{tpu_custom_call.1} parent=11 // pred_region
          %s384 = ssub.s32 512, 512
          %385 = vsyncadd [#allocation6], %s384
          %s386 = sshll.u32 [#allocation7], 4
          %s387 = int_to_ptr.vmem [resolvable:$true] %s386
          %392 = dma.hbm_to_vmem [thread:$0]  %s2, 512, %s387, [#allocation6], 128, 128, 8
        $region16: #{tpu_custom_call.1} parent=11 // pred_fallthru
          _
        // Predicated region
        $region17: #{tpu_custom_call.1} parent=11 // pred_check
          %p393 = pneg %p129
        $region18: #{tpu_custom_call.1} parent=11 // pred_check_branch
          %395 = sbr.rel (%p393) target = $region20
        $region19: #{tpu_custom_call.1} parent=11 // pred_region
          %s397 = ssub.s32 16, 16
          %398 = vsyncadd [#allocation9], %s397
          %s400 = sshll.u32 [#allocation8], 4
          %s401 = int_to_ptr.vmem [resolvable:$true] %s400
          %403 = dma.hbm_to_vmem [thread:$0]  %s3, 16, %s401, [#allocation9]
        $region20: #{tpu_custom_call.1} parent=11 // pred_fallthru
          _
        // Predicated region
        $region21: #{tpu_custom_call.1} parent=11 // pred_check
          %p404 = pneg %p150
        $region22: #{tpu_custom_call.1} parent=11 // pred_check_branch
          %406 = sbr.rel (%p404) target = $region24
        $region23: #{tpu_custom_call.1} parent=11 // pred_region
          %s408 = ssub.s32 512, 512
          %409 = vsyncadd [#allocation9], %s408
          %s410 = sshll.u32 [#allocation10], 4
          %s411 = int_to_ptr.vmem [resolvable:$true] %s410
          %416 = dma.hbm_to_vmem [thread:$0]  %s4, 512, %s411, [#allocation9], 128, 128, 8
        $region24: #{tpu_custom_call.1} parent=11 // pred_fallthru
          _
        // Predicated region
        $region25: #{tpu_custom_call.1} parent=11 // pred_check
          %p417 = pneg %p171
        $region26: #{tpu_custom_call.1} parent=11 // pred_check_branch
          %419 = sbr.rel (%p417) target = $region28
        $region27: #{tpu_custom_call.1} parent=11 // pred_region
          %s421 = ssub.s32 16, 16
          %422 = vsyncadd [#allocation12], %s421
          %s424 = sshll.u32 [#allocation11], 4
          %s425 = int_to_ptr.vmem [resolvable:$true] %s424
          %427 = dma.hbm_to_vmem [thread:$0]  %s5, 16, %s425, [#allocation12]
        $region28: #{tpu_custom_call.1} parent=11 // pred_fallthru
          _
        // Predicated region
        $region29: #{tpu_custom_call.1} parent=11 // pred_check
          %p428 = pneg %p192
        $region30: #{tpu_custom_call.1} parent=11 // pred_check_branch
          %430 = sbr.rel (%p428) target = $region32
        $region31: #{tpu_custom_call.1} parent=11 // pred_region
          %s432 = ssub.s32 512, 512
          %433 = vsyncadd [#allocation12], %s432
          %s434 = sshll.u32 [#allocation13], 4
          %s435 = int_to_ptr.vmem [resolvable:$true] %s434
          %440 = dma.hbm_to_vmem [thread:$0]  %s6, 512, %s435, [#allocation12], 128, 128, 8
        $region32: #{tpu_custom_call.1} parent=11 // pred_fallthru
          _
        // Predicated region
        $region33: #{tpu_custom_call.1} parent=11 // pred_check
          %p441 = pneg %p213
        $region34: #{tpu_custom_call.1} parent=11 // pred_check_branch
          %443 = sbr.rel (%p441) target = $region36
        $region35: #{tpu_custom_call.1} parent=11 // pred_region
          %s445 = ssub.s32 16, 16
          %446 = vsyncadd [#allocation15], %s445
          %s448 = sshll.u32 [#allocation14], 4
          %s449 = int_to_ptr.vmem [resolvable:$true] %s448
          %451 = dma.hbm_to_vmem [thread:$0]  %s7, 16, %s449, [#allocation15]
        $region36: #{tpu_custom_call.1} parent=11 // pred_fallthru
          _
        // Predicated region
        $region37: #{tpu_custom_call.1} parent=11 // pred_check
          %p452 = pneg %p234
        $region38: #{tpu_custom_call.1} parent=11 // pred_check_branch
          %454 = sbr.rel (%p452) target = $region40
        $region39: #{tpu_custom_call.1} parent=11 // pred_region
          %s456 = ssub.s32 512, 512
          %457 = vsyncadd [#allocation15], %s456
          %s458 = sshll.u32 [#allocation16], 4
          %s459 = int_to_ptr.vmem [resolvable:$true] %s458
          %464 = dma.hbm_to_vmem [thread:$0]  %s8, 512, %s459, [#allocation15], 128, 128, 8
        $region40: #{tpu_custom_call.1} parent=11 // pred_fallthru
          _
        // Predicated region
        $region41: #{tpu_custom_call.1} parent=11 // pred_check
          %p465 = pneg %p255
        $region42: #{tpu_custom_call.1} parent=11 // pred_check_branch
          %467 = sbr.rel (%p465) target = $region44
        $region43: #{tpu_custom_call.1} parent=11 // pred_region
          %s469 = ssub.s32 16, 16
          %470 = vsyncadd [#allocation18], %s469
          %s472 = sshll.u32 [#allocation17], 4
          %s473 = int_to_ptr.vmem [resolvable:$true] %s472
          %475 = dma.hbm_to_vmem [thread:$0]  %s9, 16, %s473, [#allocation18]
        $region44: #{tpu_custom_call.1} parent=11 // pred_fallthru
          _
        // Predicated region
        $region45: #{tpu_custom_call.1} parent=11 // pred_check
          %p476 = pneg %p276
        $region46: #{tpu_custom_call.1} parent=11 // pred_check_branch
          %478 = sbr.rel (%p476) target = $region48
        $region47: #{tpu_custom_call.1} parent=11 // pred_region
          %s480 = ssub.s32 512, 512
          %481 = vsyncadd [#allocation18], %s480
          %s482 = sshll.u32 [#allocation19], 4
          %s483 = int_to_ptr.vmem [resolvable:$true] %s482
          %488 = dma.hbm_to_vmem [thread:$0]  %s10, 512, %s483, [#allocation18], 128, 128, 8
        $region48: #{tpu_custom_call.1} parent=11 // pred_fallthru
          _
        // Predicated region
        $region49: #{tpu_custom_call.1} parent=11 // pred_check
          %p489 = pneg %p297
        $region50: #{tpu_custom_call.1} parent=11 // pred_check_branch
          %491 = sbr.rel (%p489) target = $region52
        $region51: #{tpu_custom_call.1} parent=11 // pred_region
          %s493 = ssub.s32 16, 16
          %494 = vsyncadd [#allocation21], %s493
          %s496 = sshll.u32 [#allocation20], 4
          %s497 = int_to_ptr.vmem [resolvable:$true] %s496
          %499 = dma.hbm_to_vmem [thread:$0]  %s11, 16, %s497, [#allocation21]
        $region52: #{tpu_custom_call.1} parent=11 // pred_fallthru
          _
        // Predicated region
        $region53: #{tpu_custom_call.1} parent=11 // pred_check
          %p500 = pneg %p318
        $region54: #{tpu_custom_call.1} parent=11 // pred_check_branch
          %502 = sbr.rel (%p500) target = $region56
        $region55: #{tpu_custom_call.1} parent=11 // pred_region
          %s504 = ssub.s32 2048, 2048
          %505 = vsyncadd [#allocation21], %s504
          %s506 = sshll.u32 [#allocation22], 4
          %s507 = int_to_ptr.vmem [resolvable:$true] %s506
          %512 = dma.hbm_to_vmem [thread:$0]  %s12, 2048, %s507, [#allocation21], 128, 128, 8
        $region56: #{tpu_custom_call.1} parent=11 // pred_fallthru
          _
        // Predicated region
        $region57: #{tpu_custom_call.1} parent=11 // pred_check
          %p513 = pneg %p339
        $region58: #{tpu_custom_call.1} parent=11 // pred_check_branch
          %515 = sbr.rel (%p513) target = $region60
        $region59: #{tpu_custom_call.1} parent=11 // pred_region
          %s517 = ssub.s32 16, 16
          %518 = vsyncadd [#allocation24], %s517
          %s520 = sshll.u32 [#allocation23], 4
          %s521 = int_to_ptr.vmem [resolvable:$true] %s520
          %523 = dma.hbm_to_vmem [thread:$0]  %s13, 16, %s521, [#allocation24]
        $region60: #{tpu_custom_call.1} parent=11 // pred_fallthru
          _
      $region12: #{tpu_custom_call.1} parent=5 // pred_fallthru
        _
      %p524 = scmp.lt.s32.totalorder %s35, 2
      // Predicated region
      $region61: #{tpu_custom_call.1} parent=5 // pred_check
        %p525 = pneg %p524
      $region62: #{tpu_custom_call.1} parent=5 // pred_check_branch
        %527 = sbr.rel (%p525) target = $region64
      $region63: #{tpu_custom_call.1} parent=5 // pred_region
        // Predicated region
        $region65: #{tpu_custom_call.1} parent=63 // pred_check
          %p528 = pneg %p55
        $region66: #{tpu_custom_call.1} parent=63 // pred_check_branch
          %530 = sbr.rel (%p528) target = $region68
        $region67: #{tpu_custom_call.1} parent=63 // pred_region
          %s531 = sand.u32 %s45, 1
          %s532 = scalar_lea.sflag [#allocation3], %s531
          %s533 = sand.u32 %s45, 1
          %s534 = smul.addr %s533, 8
          %s535 = scalar_lea.vmem [#allocation2], %s534
          %s537 = ssub.s32 128, 128
          %538 = vsyncadd %s532, %s537
          %s539 = smul.addr %s35, 128
          %s540 = scalar_lea.hbm %s0, %s539
          %s542 = sshll.u32 %s535, 4
          %s543 = int_to_ptr.vmem [resolvable:$true] %s542
          %545 = dma.hbm_to_vmem [thread:$0]  %s540, 128, %s543, %s532
        $region68: #{tpu_custom_call.1} parent=63 // pred_fallthru
          _
        // Predicated region
        $region69: #{tpu_custom_call.1} parent=63 // pred_check
          %p546 = pneg %p81
        $region70: #{tpu_custom_call.1} parent=63 // pred_check_branch
          %548 = sbr.rel (%p546) target = $region72
        $region71: #{tpu_custom_call.1} parent=63 // pred_region
          %s549 = sand.u32 %s35, 1
          %s550 = scalar_lea.sflag [#allocation6], %s549
          %s551 = sand.u32 %s71, 1
          %s552 = scalar_lea.vmem [#allocation5], %s551
          %s554 = ssub.s32 16, 16
          %555 = vsyncadd %s550, %s554
          %s556 = smul.addr %s35, 16
          %s557 = scalar_lea.hbm %s1, %s556
          %s559 = sshll.u32 %s552, 4
          %s560 = int_to_ptr.vmem [resolvable:$true] %s559
          %562 = dma.hbm_to_vmem [thread:$0]  %s557, 16, %s560, %s550
        $region72: #{tpu_custom_call.1} parent=63 // pred_fallthru
          _
      $region64: #{tpu_custom_call.1} parent=5 // pred_fallthru
        _
      %p563 = scmp.le.s32.totalorder 1, %s35
      %p564 = scmp.lt.s32.totalorder %s35, 3
      %p565 = pnand %p563, %p564
      %p566 = pneg %p565
      // Predicated region
      $region73: #{tpu_custom_call.1} parent=5 // pred_check
        _
      $region74: #{tpu_custom_call.1} parent=5 // pred_check_branch
        %568 = sbr.rel (%p565) target = $region76
      $region75: #{tpu_custom_call.1} parent=5 // pred_region
        %s569 = ssub.s32 %s35, 1
        %s570 = sand.u32 %s48, 1
        %s571 = scalar_lea.sflag [#allocation3], %s570
        %s572 = sand.u32 %s48, 1
        %s573 = smul.addr %s572, 8
        %s574 = scalar_lea.vmem [#allocation2], %s573
        // Predicated region
        $region77: #{tpu_custom_call.1} parent=75 // pred_check
          %p575 = pneg %p61
        $region78: #{tpu_custom_call.1} parent=75 // pred_check_branch
          %577 = sbr.rel (%p575) target = $region80
        $region79: #{tpu_custom_call.1} parent=75 // pred_region
          %578 = dma.done %s571, 128
        $region80: #{tpu_custom_call.1} parent=75 // pred_fallthru
          _
        %s579 = sand.u32 %s40, 1
        %s580 = scalar_lea.sflag [#allocation6], %s579
        %s581 = sand.u32 %s74, 1
        %s582 = scalar_lea.vmem [#allocation5], %s581
        // Predicated region
        $region81: #{tpu_custom_call.1} parent=75 // pred_check
          %p583 = pneg %p87
        $region82: #{tpu_custom_call.1} parent=75 // pred_check_branch
          %585 = sbr.rel (%p583) target = $region84
        $region83: #{tpu_custom_call.1} parent=75 // pred_region
          %586 = dma.done %s580, 16
        $region84: #{tpu_custom_call.1} parent=75 // pred_fallthru
          _
        // Predicated region
        $region85: #{tpu_custom_call.1} parent=75 // pred_check
          %p587 = pneg %p108
        $region86: #{tpu_custom_call.1} parent=75 // pred_check_branch
          %589 = sbr.rel (%p587) target = $region88
        $region87: #{tpu_custom_call.1} parent=75 // pred_region
          %590 = dma.done [#allocation6], 512
        $region88: #{tpu_custom_call.1} parent=75 // pred_fallthru
          _
        // Predicated region
        $region89: #{tpu_custom_call.1} parent=75 // pred_check
          %p591 = pneg %p129
        $region90: #{tpu_custom_call.1} parent=75 // pred_check_branch
          %593 = sbr.rel (%p591) target = $region92
        $region91: #{tpu_custom_call.1} parent=75 // pred_region
          %594 = dma.done [#allocation9], 16
        $region92: #{tpu_custom_call.1} parent=75 // pred_fallthru
          _
        // Predicated region
        $region93: #{tpu_custom_call.1} parent=75 // pred_check
          %p595 = pneg %p150
        $region94: #{tpu_custom_call.1} parent=75 // pred_check_branch
          %597 = sbr.rel (%p595) target = $region96
        $region95: #{tpu_custom_call.1} parent=75 // pred_region
          %598 = dma.done [#allocation9], 512
        $region96: #{tpu_custom_call.1} parent=75 // pred_fallthru
          _
        // Predicated region
        $region97: #{tpu_custom_call.1} parent=75 // pred_check
          %p599 = pneg %p171
        $region98: #{tpu_custom_call.1} parent=75 // pred_check_branch
          %601 = sbr.rel (%p599) target = $region100
        $region99: #{tpu_custom_call.1} parent=75 // pred_region
          %602 = dma.done [#allocation12], 16
        $region100: #{tpu_custom_call.1} parent=75 // pred_fallthru
          _
        // Predicated region
        $region101: #{tpu_custom_call.1} parent=75 // pred_check
          %p603 = pneg %p192
        $region102: #{tpu_custom_call.1} parent=75 // pred_check_branch
          %605 = sbr.rel (%p603) target = $region104
        $region103: #{tpu_custom_call.1} parent=75 // pred_region
          %606 = dma.done [#allocation12], 512
        $region104: #{tpu_custom_call.1} parent=75 // pred_fallthru
          _
        // Predicated region
        $region105: #{tpu_custom_call.1} parent=75 // pred_check
          %p607 = pneg %p213
        $region106: #{tpu_custom_call.1} parent=75 // pred_check_branch
          %609 = sbr.rel (%p607) target = $region108
        $region107: #{tpu_custom_call.1} parent=75 // pred_region
          %610 = dma.done [#allocation15], 16
        $region108: #{tpu_custom_call.1} parent=75 // pred_fallthru
          _
        // Predicated region
        $region109: #{tpu_custom_call.1} parent=75 // pred_check
          %p611 = pneg %p234
        $region110: #{tpu_custom_call.1} parent=75 // pred_check_branch
          %613 = sbr.rel (%p611) target = $region112
        $region111: #{tpu_custom_call.1} parent=75 // pred_region
          %614 = dma.done [#allocation15], 512
        $region112: #{tpu_custom_call.1} parent=75 // pred_fallthru
          _
        // Predicated region
        $region113: #{tpu_custom_call.1} parent=75 // pred_check
          %p615 = pneg %p255
        $region114: #{tpu_custom_call.1} parent=75 // pred_check_branch
          %617 = sbr.rel (%p615) target = $region116
        $region115: #{tpu_custom_call.1} parent=75 // pred_region
          %618 = dma.done [#allocation18], 16
        $region116: #{tpu_custom_call.1} parent=75 // pred_fallthru
          _
        // Predicated region
        $region117: #{tpu_custom_call.1} parent=75 // pred_check
          %p619 = pneg %p276
        $region118: #{tpu_custom_call.1} parent=75 // pred_check_branch
          %621 = sbr.rel (%p619) target = $region120
        $region119: #{tpu_custom_call.1} parent=75 // pred_region
          %622 = dma.done [#allocation18], 512
        $region120: #{tpu_custom_call.1} parent=75 // pred_fallthru
          _
        // Predicated region
        $region121: #{tpu_custom_call.1} parent=75 // pred_check
          %p623 = pneg %p297
        $region122: #{tpu_custom_call.1} parent=75 // pred_check_branch
          %625 = sbr.rel (%p623) target = $region124
        $region123: #{tpu_custom_call.1} parent=75 // pred_region
          %626 = dma.done [#allocation21], 16
        $region124: #{tpu_custom_call.1} parent=75 // pred_fallthru
          _
        // Predicated region
        $region125: #{tpu_custom_call.1} parent=75 // pred_check
          %p627 = pneg %p318
        $region126: #{tpu_custom_call.1} parent=75 // pred_check_branch
          %629 = sbr.rel (%p627) target = $region128
        $region127: #{tpu_custom_call.1} parent=75 // pred_region
          %630 = dma.done [#allocation21], 2048
        $region128: #{tpu_custom_call.1} parent=75 // pred_fallthru
          _
        // Predicated region
        $region129: #{tpu_custom_call.1} parent=75 // pred_check
          %p631 = pneg %p339
        $region130: #{tpu_custom_call.1} parent=75 // pred_check_branch
          %633 = sbr.rel (%p631) target = $region132
        $region131: #{tpu_custom_call.1} parent=75 // pred_region
          %634 = dma.done [#allocation24], 16
        $region132: #{tpu_custom_call.1} parent=75 // pred_fallthru
          _
        %s635 = sand.u32 %s48, 1
        %s636 = scalar_lea.sflag [#allocation3], %s635
        %s637 = sand.u32 %s48, 1
        %s638 = smul.addr %s637, 8
        %s639 = scalar_lea.vmem [#allocation2], %s638
        %p640 = pneg %p61
        %p641 = pneg %p58
        %s642 = sand.u32 %s40, 1
        %s643 = scalar_lea.sflag [#allocation6], %s642
        %s644 = sand.u32 %s74, 1
        %s645 = scalar_lea.vmem [#allocation5], %s644
        %p646 = pneg %p87
        %p647 = pneg %p84
        %p648 = pneg %p108
        %p649 = pneg %p105
        %p650 = pneg %p129
        %p651 = pneg %p126
        %p652 = pneg %p150
        %p653 = pneg %p147
        %p654 = pneg %p171
        %p655 = pneg %p168
        %p656 = pneg %p192
        %p657 = pneg %p189
        %p658 = pneg %p213
        %p659 = pneg %p210
        %p660 = pneg %p234
        %p661 = pneg %p231
        %p662 = pneg %p255
        %p663 = pneg %p252
        %p664 = pneg %p276
        %p665 = pneg %p273
        %p666 = pneg %p297
        %p667 = pneg %p294
        %p668 = pneg %p318
        %p669 = pneg %p315
        %p670 = pneg %p339
        %p671 = pneg %p336
        %p672 = pneg %p365
        %p673 = pneg %p362
        %s674 = sand.u32 %s352, 1
        %s675 = scalar_lea.sflag [#allocation4], %s674
        %s676 = sand.u32 %s352, 1
        %s677 = smul.addr %s676, 8
        %s678 = scalar_lea.vmem [#allocation25], %s677
        %v679 = vld [vmem:[%s574] sm:$0xff]
        %v680 = vld [vmem:[%s582] sm:$0x1]
        %v681 = vxor.u32 %v680, 2147483648
        %v682 = vmul.f32 %v681, 1.442695
        %v683 = vpow.pop %v682
        %v684 = vadd.f32 %v683, 1.0
        %v685 = vrcp.pop %v684
        %v686 = vmul.f32 1.0, %v685
        %v687 = vmul.f32 %v680, %v686
        %v688 = vld [vmem:[#allocation7] sm:$0xff]
        %v689 = vld [vmem:[#allocation7 + $0x8] sm:$0xff]
        %v690 = vld [vmem:[#allocation7 + $0x10] sm:$0xff]
        %v691 = vld [vmem:[#allocation7 + $0x18] sm:$0xff]
        %v692 = vld [vmem:[#allocation8] sm:$0x1]
        %vm693 = vcmask 261120
        %v695 = vsel %vm693, %v687, 0
        %697 = vmatprep.subr.mxu0 0.0
        %698 = vmatpush1.msra.mxu0 %v688
        %699 = vmatprep.subr.mxu0 0.0
        %700 = vmatpush1.msra.mxu0 %v689
        %701 = vmatprep.subr.mxu0 0.0
        %702 = vmatpush1.msra.mxu0 %v690
        %703 = vmatprep.subr.mxu0 0.0
        %704 = vmatpush1.msra.mxu0 %v691
        %705 = vmatprep.subr.mxu0 0.0
        %706 = vmatpush1.msra.mxu0 0.0
        %707 = vmatprep.subr.mxu0 0.0
        %708 = vmatpush1.msra.mxu0 0.0
        %709 = vmatprep.subr.mxu0 0.0
        %710 = vmatpush1.msra.mxu0 0.0
        %711 = vmatprep.subr.mxu0 0.0
        %712 = vmatpush1.msra.mxu0 0.0
        %713 = vmatprep.subr.mxu0 0.0
        %714 = vmatpush1.msra.mxu0 0.0
        %715 = vmatprep.subr.mxu0 0.0
        %716 = vmatpush1.msra.mxu0 0.0
        %717 = vmatprep.subr.mxu0 0.0
        %718 = vmatpush1.msra.mxu0 0.0
        %719 = vmatprep.subr.mxu0 0.0
        %720 = vmatpush1.msra.mxu0 0.0
        %721 = vmatprep.subr.mxu0 0.0
        %722 = vmatpush1.msra.mxu0 0.0
        %723 = vmatprep.subr.mxu0 0.0
        %724 = vmatpush1.msra.mxu0 0.0
        %725 = vmatprep.subr.mxu0 0.0
        %726 = vmatpush1.msra.mxu0 0.0
        %727 = vmatprep.subr.mxu0 0.0
        %728 = vmatpush1.msra.mxu0 0.0
        %729 = vmatprep.subr.mxu0 0.0
        %730 = vmatpush1.msra.mxu0 0.0
        %731 = vmatprep.subr.mxu0 0.0
        %732 = vmatpush1.msra.mxu0 0.0
        %733 = vmatprep.subr.mxu0 0.0
        %734 = vmatpush1.msra.mxu0 0.0
        %735 = vmatprep.subr.mxu0 0.0
        %736 = vmatpush1.msra.mxu0 0.0
        %737 = vmatprep.subr.mxu0 0.0
        %738 = vmatpush1.msra.mxu0 0.0
        %739 = vmatprep.subr.mxu0 0.0
        %740 = vmatpush1.msra.mxu0 0.0
        %741 = vmatprep.subr.mxu0 0.0
        %742 = vmatpush1.msra.mxu0 0.0
        %743 = vmatprep.subr.mxu0 0.0
        %744 = vmatpush1.msra.mxu0 0.0
        %745 = vmatprep.subr.mxu0 0.0
        %746 = vmatpush1.msra.mxu0 0.0
        %747 = vmatprep.subr.mxu0 0.0
        %748 = vmatpush1.msra.mxu0 0.0
        %749 = vmatprep.subr.mxu0 0.0
        %750 = vmatpush1.msra.mxu0 0.0
        %751 = vmatprep.subr.mxu0 0.0
        %752 = vmatpush1.msra.mxu0 0.0
        %753 = vmatprep.subr.mxu0 0.0
        %754 = vmatpush1.msra.mxu0 0.0
        %755 = vmatprep.subr.mxu0 0.0
        %756 = vmatpush1.msra.mxu0 0.0
        %757 = vmatprep.subr.mxu0 0.0
        %758 = vmatpush1.msra.mxu0 0.0
        %759 = vmatprep.subr.mxu0 0.0
        %760 = vmatpush1.msra.mxu0 0.0
        %761 = vmatprep.mubr.f32.mxu0 0.0
        %762 = vmatmul.mubr.f32.gmra.mrb[0].mxu0 %v695
        %v763 = vpop.f32.mrb[0].mxu0
        %v764 = vadd.f32 %v692, %v763
        %v765 = vpop.f32.mrb[0].mxu0
        %766 = vdwg.mxu0
        %v767 = vsel %vm693, %v679, 0.0
        %768 = vadd.xlane.f32.xlu0 %v767
        %v769 = vpop.xlane.xlu0 %768
        %v770 = vrcp.pop 32.0
        %v771 = vmul.f32 %v769, %v770
        %v772 = vsub.f32 %v679, %v771
        %v773 = vmul.f32 %v772, %v772
        %v774 = vsel %vm693, %v773, 0.0
        %775 = vadd.xlane.f32.xlu0 %v774
        %v776 = vpop.xlane.xlu0 %775
        %v777 = vmul.f32 %v776, %v770
        %v778 = vadd.f32 %v777, 1e-05
        %v779 = vrsqrt.pop %v778
        %v780 = vmul.f32 %v772, %v779
        %v781 = vadd.f32 %v764, 1.0
        %v782 = vlaneseq
        %v783 = vshrl.u32 %v782, 7
        %v784 = vsub.s32 0, %v783
        %v785 = vrot.slane %v781, %v784
        %v786 = vmul.f32 %v780, %v785
        %v787 = vlaneseq
        %v788 = vshrl.u32 %v787, 7
        %v789 = vsub.s32 0, %v788
        %v790 = vrot.slane %v764, %v789
        %792 = vrot.lane.b32.xlu0 %v790, 96
        %v793 = vpop.permute.xlu0 %792
        %v795 = vadd.f32 %v786, %v793
        %v796 = vld [vmem:[#allocation10] sm:$0xff]
        %v797 = vld [vmem:[#allocation10 + $0x8] sm:$0xff]
        %v798 = vld [vmem:[#allocation10 + $0x10] sm:$0xff]
        %v799 = vld [vmem:[#allocation10 + $0x18] sm:$0xff]
        %v800 = vld [vmem:[#allocation11] sm:$0x1]
        %v802 = vlaneseq
        %v803 = vshrl.u32 %v802, 7
        %v804 = vsub.s32 0, %v803
        %v805 = vrot.slane %v800, %v804
        %v808 = vsel %vm693, %v795, 0
        %810 = vmatprep.subr.mxu0 0.0
        %811 = vmatpush1.msra.mxu0 %v796
        %812 = vmatprep.subr.mxu0 0.0
        %813 = vmatpush1.msra.mxu0 %v797
        %814 = vmatprep.subr.mxu0 0.0
        %815 = vmatpush1.msra.mxu0 %v798
        %816 = vmatprep.subr.mxu0 0.0
        %817 = vmatpush1.msra.mxu0 %v799
        %818 = vmatprep.subr.mxu0 0.0
        %819 = vmatpush1.msra.mxu0 0.0
        %820 = vmatprep.subr.mxu0 0.0
        %821 = vmatpush1.msra.mxu0 0.0
        %822 = vmatprep.subr.mxu0 0.0
        %823 = vmatpush1.msra.mxu0 0.0
        %824 = vmatprep.subr.mxu0 0.0
        %825 = vmatpush1.msra.mxu0 0.0
        %826 = vmatprep.subr.mxu0 0.0
        %827 = vmatpush1.msra.mxu0 0.0
        %828 = vmatprep.subr.mxu0 0.0
        %829 = vmatpush1.msra.mxu0 0.0
        %830 = vmatprep.subr.mxu0 0.0
        %831 = vmatpush1.msra.mxu0 0.0
        %832 = vmatprep.subr.mxu0 0.0
        %833 = vmatpush1.msra.mxu0 0.0
        %834 = vmatprep.subr.mxu0 0.0
        %835 = vmatpush1.msra.mxu0 0.0
        %836 = vmatprep.subr.mxu0 0.0
        %837 = vmatpush1.msra.mxu0 0.0
        %838 = vmatprep.subr.mxu0 0.0
        %839 = vmatpush1.msra.mxu0 0.0
        %840 = vmatprep.subr.mxu0 0.0
        %841 = vmatpush1.msra.mxu0 0.0
        %842 = vmatprep.subr.mxu0 0.0
        %843 = vmatpush1.msra.mxu0 0.0
        %844 = vmatprep.subr.mxu0 0.0
        %845 = vmatpush1.msra.mxu0 0.0
        %846 = vmatprep.subr.mxu0 0.0
        %847 = vmatpush1.msra.mxu0 0.0
        %848 = vmatprep.subr.mxu0 0.0
        %849 = vmatpush1.msra.mxu0 0.0
        %850 = vmatprep.subr.mxu0 0.0
        %851 = vmatpush1.msra.mxu0 0.0
        %852 = vmatprep.subr.mxu0 0.0
        %853 = vmatpush1.msra.mxu0 0.0
        %854 = vmatprep.subr.mxu0 0.0
        %855 = vmatpush1.msra.mxu0 0.0
        %856 = vmatprep.subr.mxu0 0.0
        %857 = vmatpush1.msra.mxu0 0.0
        %858 = vmatprep.subr.mxu0 0.0
        %859 = vmatpush1.msra.mxu0 0.0
        %860 = vmatprep.subr.mxu0 0.0
        %861 = vmatpush1.msra.mxu0 0.0
        %862 = vmatprep.subr.mxu0 0.0
        %863 = vmatpush1.msra.mxu0 0.0
        %864 = vmatprep.subr.mxu0 0.0
        %865 = vmatpush1.msra.mxu0 0.0
        %866 = vmatprep.subr.mxu0 0.0
        %867 = vmatpush1.msra.mxu0 0.0
        %868 = vmatprep.subr.mxu0 0.0
        %869 = vmatpush1.msra.mxu0 0.0
        %870 = vmatprep.subr.mxu0 0.0
        %871 = vmatpush1.msra.mxu0 0.0
        %872 = vmatprep.subr.mxu0 0.0
        %873 = vmatpush1.msra.mxu0 0.0
        %874 = vmatprep.mubr.f32.mxu0 0.0
        %875 = vmatmul.mubr.f32.gmra.mrb[0].mxu0 %v808
        %v876 = vpop.f32.mrb[0].mxu0
        %v877 = vadd.f32 %v805, %v876
        %v878 = vpop.f32.mrb[0].mxu0
        %879 = vdwg.mxu0
        %881 = vrot.lane.b32.xlu0 %v877, 96
        %v882 = vpop.permute.xlu0 %881
        %vm883 = vcmask 64512
        %v884 = vsel %vm883, %v877, 0
        %v886 = vsel %vm883, %v882, 0
        %888 = vmatprep.subr.mxu0 0.0
        %889 = vmatpush1.xpose.msra.mxu0 %v886
        %890 = vmatprep.subr.mxu0 0.0
        %891 = vmatpush1.xpose.msra.mxu0 0.0
        %892 = vmatprep.subr.mxu0 0.0
        %893 = vmatpush1.xpose.msra.mxu0 0.0
        %894 = vmatprep.subr.mxu0 0.0
        %895 = vmatpush1.xpose.msra.mxu0 0.0
        %896 = vmatprep.subr.mxu0 0.0
        %897 = vmatpush1.xpose.msra.mxu0 0.0
        %898 = vmatprep.subr.mxu0 0.0
        %899 = vmatpush1.xpose.msra.mxu0 0.0
        %900 = vmatprep.subr.mxu0 0.0
        %901 = vmatpush1.xpose.msra.mxu0 0.0
        %902 = vmatprep.subr.mxu0 0.0
        %903 = vmatpush1.xpose.msra.mxu0 0.0
        %904 = vmatprep.subr.mxu0 0.0
        %905 = vmatpush1.xpose.msra.mxu0 0.0
        %906 = vmatprep.subr.mxu0 0.0
        %907 = vmatpush1.xpose.msra.mxu0 0.0
        %908 = vmatprep.subr.mxu0 0.0
        %909 = vmatpush1.xpose.msra.mxu0 0.0
        %910 = vmatprep.subr.mxu0 0.0
        %911 = vmatpush1.xpose.msra.mxu0 0.0
        %912 = vmatprep.subr.mxu0 0.0
        %913 = vmatpush1.xpose.msra.mxu0 0.0
        %914 = vmatprep.subr.mxu0 0.0
        %915 = vmatpush1.xpose.msra.mxu0 0.0
        %916 = vmatprep.subr.mxu0 0.0
        %917 = vmatpush1.xpose.msra.mxu0 0.0
        %918 = vmatprep.subr.mxu0 0.0
        %919 = vmatpush1.xpose.msra.mxu0 0.0
        %920 = vmatprep.subr.mxu0 0.0
        %921 = vmatpush1.xpose.msra.mxu0 0.0
        %922 = vmatprep.subr.mxu0 0.0
        %923 = vmatpush1.xpose.msra.mxu0 0.0
        %924 = vmatprep.subr.mxu0 0.0
        %925 = vmatpush1.xpose.msra.mxu0 0.0
        %926 = vmatprep.subr.mxu0 0.0
        %927 = vmatpush1.xpose.msra.mxu0 0.0
        %928 = vmatprep.subr.mxu0 0.0
        %929 = vmatpush1.xpose.msra.mxu0 0.0
        %930 = vmatprep.subr.mxu0 0.0
        %931 = vmatpush1.xpose.msra.mxu0 0.0
        %932 = vmatprep.subr.mxu0 0.0
        %933 = vmatpush1.xpose.msra.mxu0 0.0
        %934 = vmatprep.subr.mxu0 0.0
        %935 = vmatpush1.xpose.msra.mxu0 0.0
        %936 = vmatprep.subr.mxu0 0.0
        %937 = vmatpush1.xpose.msra.mxu0 0.0
        %938 = vmatprep.subr.mxu0 0.0
        %939 = vmatpush1.xpose.msra.mxu0 0.0
        %940 = vmatprep.subr.mxu0 0.0
        %941 = vmatpush1.xpose.msra.mxu0 0.0
        %942 = vmatprep.subr.mxu0 0.0
        %943 = vmatpush1.xpose.msra.mxu0 0.0
        %944 = vmatprep.subr.mxu0 0.0
        %945 = vmatpush1.xpose.msra.mxu0 0.0
        %946 = vmatprep.subr.mxu0 0.0
        %947 = vmatpush1.xpose.msra.mxu0 0.0
        %948 = vmatprep.subr.mxu0 0.0
        %949 = vmatpush1.xpose.msra.mxu0 0.0
        %950 = vmatprep.subr.mxu0 0.0
        %951 = vmatpush1.xpose.msra.mxu0 0.0
        %952 = vmatprep.mubr.f32.mxu0 0.0
        %953 = vmatmul.mubr.f32.gmra.mrb[0].mxu0 %v884
        %v954 = vpop.f32.mrb[0].mxu0
        %v955 = vadd.f32 0.0, %v954
        %v956 = vpop.f32.mrb[0].mxu0
        %957 = vdwg.mxu0
        %v958 = vmul.f32 %v955, 0.35355338
        %v959 = vsel %vm883, %v958, -inf
        %960 = vmax.xlane.f32.xlu0 %v959
        %v961 = vpop.xlane.xlu0 %960
        %v962 = vsub.f32 %v958, %v961
        %v963 = vmul.f32 %v962, 1.442695
        %v964 = vpow.pop %v963
        %v965 = vsel %vm883, %v964, 0.0
        %966 = vadd.xlane.f32.xlu0 %v965
        %v967 = vpop.xlane.xlu0 %966
        %v968 = vrcp.pop %v967
        %v969 = vmul.f32 %v964, %v968
        %970 = vrot.lane.b32.xlu0 %v877, 64
        %v971 = vpop.permute.xlu0 %970
        %v974 = vsel %vm883, %v969, 0
        %976 = vmatprep.subr.mxu0 0.0
        %977 = vmatpush1.msra.mxu0 %v971
        %978 = vmatprep.subr.mxu0 0.0
        %979 = vmatpush1.msra.mxu0 0.0
        %980 = vmatprep.subr.mxu0 0.0
        %981 = vmatpush1.msra.mxu0 0.0
        %982 = vmatprep.subr.mxu0 0.0
        %983 = vmatpush1.msra.mxu0 0.0
        %984 = vmatprep.subr.mxu0 0.0
        %985 = vmatpush1.msra.mxu0 0.0
        %986 = vmatprep.subr.mxu0 0.0
        %987 = vmatpush1.msra.mxu0 0.0
        %988 = vmatprep.subr.mxu0 0.0
        %989 = vmatpush1.msra.mxu0 0.0
        %990 = vmatprep.subr.mxu0 0.0
        %991 = vmatpush1.msra.mxu0 0.0
        %992 = vmatprep.subr.mxu0 0.0
        %993 = vmatpush1.msra.mxu0 0.0
        %994 = vmatprep.subr.mxu0 0.0
        %995 = vmatpush1.msra.mxu0 0.0
        %996 = vmatprep.subr.mxu0 0.0
        %997 = vmatpush1.msra.mxu0 0.0
        %998 = vmatprep.subr.mxu0 0.0
        %999 = vmatpush1.msra.mxu0 0.0
        %1000 = vmatprep.subr.mxu0 0.0
        %1001 = vmatpush1.msra.mxu0 0.0
        %1002 = vmatprep.subr.mxu0 0.0
        %1003 = vmatpush1.msra.mxu0 0.0
        %1004 = vmatprep.subr.mxu0 0.0
        %1005 = vmatpush1.msra.mxu0 0.0
        %1006 = vmatprep.subr.mxu0 0.0
        %1007 = vmatpush1.msra.mxu0 0.0
        %1008 = vmatprep.subr.mxu0 0.0
        %1009 = vmatpush1.msra.mxu0 0.0
        %1010 = vmatprep.subr.mxu0 0.0
        %1011 = vmatpush1.msra.mxu0 0.0
        %1012 = vmatprep.subr.mxu0 0.0
        %1013 = vmatpush1.msra.mxu0 0.0
        %1014 = vmatprep.subr.mxu0 0.0
        %1015 = vmatpush1.msra.mxu0 0.0
        %1016 = vmatprep.subr.mxu0 0.0
        %1017 = vmatpush1.msra.mxu0 0.0
        %1018 = vmatprep.subr.mxu0 0.0
        %1019 = vmatpush1.msra.mxu0 0.0
        %1020 = vmatprep.subr.mxu0 0.0
        %1021 = vmatpush1.msra.mxu0 0.0
        %1022 = vmatprep.subr.mxu0 0.0
        %1023 = vmatpush1.msra.mxu0 0.0
        %1024 = vmatprep.subr.mxu0 0.0
        %1025 = vmatpush1.msra.mxu0 0.0
        %1026 = vmatprep.subr.mxu0 0.0
        %1027 = vmatpush1.msra.mxu0 0.0
        %1028 = vmatprep.subr.mxu0 0.0
        %1029 = vmatpush1.msra.mxu0 0.0
        %1030 = vmatprep.subr.mxu0 0.0
        %1031 = vmatpush1.msra.mxu0 0.0
        %1032 = vmatprep.subr.mxu0 0.0
        %1033 = vmatpush1.msra.mxu0 0.0
        %1034 = vmatprep.subr.mxu0 0.0
        %1035 = vmatpush1.msra.mxu0 0.0
        %1036 = vmatprep.subr.mxu0 0.0
        %1037 = vmatpush1.msra.mxu0 0.0
        %1038 = vmatprep.subr.mxu0 0.0
        %1039 = vmatpush1.msra.mxu0 0.0
        %1040 = vmatprep.mubr.f32.mxu0 0.0
        %1041 = vmatmul.mubr.f32.gmra.mrb[0].mxu0 %v974
        %v1042 = vpop.f32.mrb[0].mxu0
        %v1043 = vadd.f32 0.0, %v1042
        %v1044 = vpop.f32.mrb[0].mxu0
        %1045 = vdwg.mxu0
        %v1046 = vld [vmem:[#allocation13] sm:$0xff]
        %1047 = vrot.lane.b32.xlu0 %v877, 120
        %v1048 = vpop.permute.xlu0 %1047
        %1049 = vrot.lane.b32.xlu0 %v877, 88
        %v1050 = vpop.permute.xlu0 %1049
        %v1051 = vsel %vm883, %v1048, 0
        %v1053 = vsel %vm883, %v1050, 0
        %1055 = vmatprep.subr.mxu0 0.0
        %1056 = vmatpush1.xpose.msra.mxu0 %v1053
        %1057 = vmatprep.subr.mxu0 0.0
        %1058 = vmatpush1.xpose.msra.mxu0 0.0
        %1059 = vmatprep.subr.mxu0 0.0
        %1060 = vmatpush1.xpose.msra.mxu0 0.0
        %1061 = vmatprep.subr.mxu0 0.0
        %1062 = vmatpush1.xpose.msra.mxu0 0.0
        %1063 = vmatprep.subr.mxu0 0.0
        %1064 = vmatpush1.xpose.msra.mxu0 0.0
        %1065 = vmatprep.subr.mxu0 0.0
        %1066 = vmatpush1.xpose.msra.mxu0 0.0
        %1067 = vmatprep.subr.mxu0 0.0
        %1068 = vmatpush1.xpose.msra.mxu0 0.0
        %1069 = vmatprep.subr.mxu0 0.0
        %1070 = vmatpush1.xpose.msra.mxu0 0.0
        %1071 = vmatprep.subr.mxu0 0.0
        %1072 = vmatpush1.xpose.msra.mxu0 0.0
        %1073 = vmatprep.subr.mxu0 0.0
        %1074 = vmatpush1.xpose.msra.mxu0 0.0
        %1075 = vmatprep.subr.mxu0 0.0
        %1076 = vmatpush1.xpose.msra.mxu0 0.0
        %1077 = vmatprep.subr.mxu0 0.0
        %1078 = vmatpush1.xpose.msra.mxu0 0.0
        %1079 = vmatprep.subr.mxu0 0.0
        %1080 = vmatpush1.xpose.msra.mxu0 0.0
        %1081 = vmatprep.subr.mxu0 0.0
        %1082 = vmatpush1.xpose.msra.mxu0 0.0
        %1083 = vmatprep.subr.mxu0 0.0
        %1084 = vmatpush1.xpose.msra.mxu0 0.0
        %1085 = vmatprep.subr.mxu0 0.0
        %1086 = vmatpush1.xpose.msra.mxu0 0.0
        %1087 = vmatprep.subr.mxu0 0.0
        %1088 = vmatpush1.xpose.msra.mxu0 0.0
        %1089 = vmatprep.subr.mxu0 0.0
        %1090 = vmatpush1.xpose.msra.mxu0 0.0
        %1091 = vmatprep.subr.mxu0 0.0
        %1092 = vmatpush1.xpose.msra.mxu0 0.0
        %1093 = vmatprep.subr.mxu0 0.0
        %1094 = vmatpush1.xpose.msra.mxu0 0.0
        %1095 = vmatprep.subr.mxu0 0.0
        %1096 = vmatpush1.xpose.msra.mxu0 0.0
        %1097 = vmatprep.subr.mxu0 0.0
        %1098 = vmatpush1.xpose.msra.mxu0 0.0
        %1099 = vmatprep.subr.mxu0 0.0
        %1100 = vmatpush1.xpose.msra.mxu0 0.0
        %1101 = vmatprep.subr.mxu0 0.0
        %1102 = vmatpush1.xpose.msra.mxu0 0.0
        %1103 = vmatprep.subr.mxu0 0.0
        %1104 = vmatpush1.xpose.msra.mxu0 0.0
        %1105 = vmatprep.subr.mxu0 0.0
        %1106 = vmatpush1.xpose.msra.mxu0 0.0
        %1107 = vmatprep.subr.mxu0 0.0
        %1108 = vmatpush1.xpose.msra.mxu0 0.0
        %1109 = vmatprep.subr.mxu0 0.0
        %1110 = vmatpush1.xpose.msra.mxu0 0.0
        %1111 = vmatprep.subr.mxu0 0.0
        %1112 = vmatpush1.xpose.msra.mxu0 0.0
        %1113 = vmatprep.subr.mxu0 0.0
        %1114 = vmatpush1.xpose.msra.mxu0 0.0
        %1115 = vmatprep.subr.mxu0 0.0
        %1116 = vmatpush1.xpose.msra.mxu0 0.0
        %1117 = vmatprep.subr.mxu0 0.0
        %1118 = vmatpush1.xpose.msra.mxu0 0.0
        %1119 = vmatprep.mubr.f32.mxu0 0.0
        %1120 = vmatmul.mubr.f32.gmra.mrb[0].mxu0 %v1051
        %v1121 = vpop.f32.mrb[0].mxu0
        %v1122 = vadd.f32 0.0, %v1121
        %v1123 = vpop.f32.mrb[0].mxu0
        %1124 = vdwg.mxu0
        %v1125 = vmul.f32 %v1122, 0.35355338
        %v1126 = vsel %vm883, %v1125, -inf
        %1127 = vmax.xlane.f32.xlu0 %v1126
        %v1128 = vpop.xlane.xlu0 %1127
        %v1129 = vsub.f32 %v1125, %v1128
        %v1130 = vmul.f32 %v1129, 1.442695
        %v1131 = vpow.pop %v1130
        %v1132 = vsel %vm883, %v1131, 0.0
        %1133 = vadd.xlane.f32.xlu0 %v1132
        %v1134 = vpop.xlane.xlu0 %1133
        %v1135 = vrcp.pop %v1134
        %v1136 = vmul.f32 %v1131, %v1135
        %1137 = vrot.lane.b32.xlu0 %v877, 56
        %v1138 = vpop.permute.xlu0 %1137
        %v1141 = vsel %vm883, %v1136, 0
        %1143 = vmatprep.subr.mxu0 0.0
        %1144 = vmatpush1.msra.mxu0 %v1138
        %1145 = vmatprep.subr.mxu0 0.0
        %1146 = vmatpush1.msra.mxu0 0.0
        %1147 = vmatprep.subr.mxu0 0.0
        %1148 = vmatpush1.msra.mxu0 0.0
        %1149 = vmatprep.subr.mxu0 0.0
        %1150 = vmatpush1.msra.mxu0 0.0
        %1151 = vmatprep.subr.mxu0 0.0
        %1152 = vmatpush1.msra.mxu0 0.0
        %1153 = vmatprep.subr.mxu0 0.0
        %1154 = vmatpush1.msra.mxu0 0.0
        %1155 = vmatprep.subr.mxu0 0.0
        %1156 = vmatpush1.msra.mxu0 0.0
        %1157 = vmatprep.subr.mxu0 0.0
        %1158 = vmatpush1.msra.mxu0 0.0
        %1159 = vmatprep.subr.mxu0 0.0
        %1160 = vmatpush1.msra.mxu0 0.0
        %1161 = vmatprep.subr.mxu0 0.0
        %1162 = vmatpush1.msra.mxu0 0.0
        %1163 = vmatprep.subr.mxu0 0.0
        %1164 = vmatpush1.msra.mxu0 0.0
        %1165 = vmatprep.subr.mxu0 0.0
        %1166 = vmatpush1.msra.mxu0 0.0
        %1167 = vmatprep.subr.mxu0 0.0
        %1168 = vmatpush1.msra.mxu0 0.0
        %1169 = vmatprep.subr.mxu0 0.0
        %1170 = vmatpush1.msra.mxu0 0.0
        %1171 = vmatprep.subr.mxu0 0.0
        %1172 = vmatpush1.msra.mxu0 0.0
        %1173 = vmatprep.subr.mxu0 0.0
        %1174 = vmatpush1.msra.mxu0 0.0
        %1175 = vmatprep.subr.mxu0 0.0
        %1176 = vmatpush1.msra.mxu0 0.0
        %1177 = vmatprep.subr.mxu0 0.0
        %1178 = vmatpush1.msra.mxu0 0.0
        %1179 = vmatprep.subr.mxu0 0.0
        %1180 = vmatpush1.msra.mxu0 0.0
        %1181 = vmatprep.subr.mxu0 0.0
        %1182 = vmatpush1.msra.mxu0 0.0
        %1183 = vmatprep.subr.mxu0 0.0
        %1184 = vmatpush1.msra.mxu0 0.0
        %1185 = vmatprep.subr.mxu0 0.0
        %1186 = vmatpush1.msra.mxu0 0.0
        %1187 = vmatprep.subr.mxu0 0.0
        %1188 = vmatpush1.msra.mxu0 0.0
        %1189 = vmatprep.subr.mxu0 0.0
        %1190 = vmatpush1.msra.mxu0 0.0
        %1191 = vmatprep.subr.mxu0 0.0
        %1192 = vmatpush1.msra.mxu0 0.0
        %1193 = vmatprep.subr.mxu0 0.0
        %1194 = vmatpush1.msra.mxu0 0.0
        %1195 = vmatprep.subr.mxu0 0.0
        %1196 = vmatpush1.msra.mxu0 0.0
        %1197 = vmatprep.subr.mxu0 0.0
        %1198 = vmatpush1.msra.mxu0 0.0
        %1199 = vmatprep.subr.mxu0 0.0
        %1200 = vmatpush1.msra.mxu0 0.0
        %1201 = vmatprep.subr.mxu0 0.0
        %1202 = vmatpush1.msra.mxu0 0.0
        %1203 = vmatprep.subr.mxu0 0.0
        %1204 = vmatpush1.msra.mxu0 0.0
        %1205 = vmatprep.subr.mxu0 0.0
        %1206 = vmatpush1.msra.mxu0 0.0
        %1207 = vmatprep.mubr.f32.mxu0 0.0
        %1208 = vmatmul.mubr.f32.gmra.mrb[0].mxu0 %v1141
        %v1209 = vpop.f32.mrb[0].mxu0
        %v1210 = vadd.f32 0.0, %v1209
        %v1211 = vpop.f32.mrb[0].mxu0
        %1212 = vdwg.mxu0
        %v1213 = vld [vmem:[#allocation13 + $0x8] sm:$0xff]
        %v1215 = vsel %vm883, %v1210, 0
        %1217 = vmatprep.subr.mxu0 0.0
        %1218 = vmatpush1.msra.mxu0 %v1213
        %1219 = vmatprep.subr.mxu0 0.0
        %1220 = vmatpush1.msra.mxu0 0.0
        %1221 = vmatprep.subr.mxu0 0.0
        %1222 = vmatpush1.msra.mxu0 0.0
        %1223 = vmatprep.subr.mxu0 0.0
        %1224 = vmatpush1.msra.mxu0 0.0
        %1225 = vmatprep.subr.mxu0 0.0
        %1226 = vmatpush1.msra.mxu0 0.0
        %1227 = vmatprep.subr.mxu0 0.0
        %1228 = vmatpush1.msra.mxu0 0.0
        %1229 = vmatprep.subr.mxu0 0.0
        %1230 = vmatpush1.msra.mxu0 0.0
        %1231 = vmatprep.subr.mxu0 0.0
        %1232 = vmatpush1.msra.mxu0 0.0
        %1233 = vmatprep.subr.mxu0 0.0
        %1234 = vmatpush1.msra.mxu0 0.0
        %1235 = vmatprep.subr.mxu0 0.0
        %1236 = vmatpush1.msra.mxu0 0.0
        %1237 = vmatprep.subr.mxu0 0.0
        %1238 = vmatpush1.msra.mxu0 0.0
        %1239 = vmatprep.subr.mxu0 0.0
        %1240 = vmatpush1.msra.mxu0 0.0
        %1241 = vmatprep.subr.mxu0 0.0
        %1242 = vmatpush1.msra.mxu0 0.0
        %1243 = vmatprep.subr.mxu0 0.0
        %1244 = vmatpush1.msra.mxu0 0.0
        %1245 = vmatprep.subr.mxu0 0.0
        %1246 = vmatpush1.msra.mxu0 0.0
        %1247 = vmatprep.subr.mxu0 0.0
        %1248 = vmatpush1.msra.mxu0 0.0
        %1249 = vmatprep.subr.mxu0 0.0
        %1250 = vmatpush1.msra.mxu0 0.0
        %1251 = vmatprep.subr.mxu0 0.0
        %1252 = vmatpush1.msra.mxu0 0.0
        %1253 = vmatprep.subr.mxu0 0.0
        %1254 = vmatpush1.msra.mxu0 0.0
        %1255 = vmatprep.subr.mxu0 0.0
        %1256 = vmatpush1.msra.mxu0 0.0
        %1257 = vmatprep.subr.mxu0 0.0
        %1258 = vmatpush1.msra.mxu0 0.0
        %1259 = vmatprep.subr.mxu0 0.0
        %1260 = vmatpush1.msra.mxu0 0.0
        %1261 = vmatprep.subr.mxu0 0.0
        %1262 = vmatpush1.msra.mxu0 0.0
        %1263 = vmatprep.subr.mxu0 0.0
        %1264 = vmatpush1.msra.mxu0 0.0
        %1265 = vmatprep.subr.mxu0 0.0
        %1266 = vmatpush1.msra.mxu0 0.0
        %1267 = vmatprep.subr.mxu0 0.0
        %1268 = vmatpush1.msra.mxu0 0.0
        %1269 = vmatprep.subr.mxu0 0.0
        %1270 = vmatpush1.msra.mxu0 0.0
        %1271 = vmatprep.subr.mxu0 0.0
        %1272 = vmatpush1.msra.mxu0 0.0
        %1273 = vmatprep.subr.mxu0 0.0
        %1274 = vmatpush1.msra.mxu0 0.0
        %1275 = vmatprep.subr.mxu0 0.0
        %1276 = vmatpush1.msra.mxu0 0.0
        %1277 = vmatprep.subr.mxu0 0.0
        %1278 = vmatpush1.msra.mxu0 0.0
        %1279 = vmatprep.subr.mxu0 0.0
        %1280 = vmatpush1.msra.mxu0 0.0
        %1281 = vmatprep.mubr.f32.mxu0 0.0
        %1282 = vmatmul.mubr.f32.gmra.mrb[0].mxu0 %v1215
        %v1283 = vpop.f32.mrb[0].mxu0
        %v1284 = vadd.f32 0.0, %v1283
        %v1285 = vpop.f32.mrb[0].mxu0
        %1286 = vdwg.mxu0
        %v1288 = vsel %vm883, %v1043, 0
        %1290 = vmatprep.subr.mxu0 0.0
        %1291 = vmatpush1.msra.mxu0 %v1046
        %1292 = vmatprep.subr.mxu0 0.0
        %1293 = vmatpush1.msra.mxu0 0.0
        %1294 = vmatprep.subr.mxu0 0.0
        %1295 = vmatpush1.msra.mxu0 0.0
        %1296 = vmatprep.subr.mxu0 0.0
        %1297 = vmatpush1.msra.mxu0 0.0
        %1298 = vmatprep.subr.mxu0 0.0
        %1299 = vmatpush1.msra.mxu0 0.0
        %1300 = vmatprep.subr.mxu0 0.0
        %1301 = vmatpush1.msra.mxu0 0.0
        %1302 = vmatprep.subr.mxu0 0.0
        %1303 = vmatpush1.msra.mxu0 0.0
        %1304 = vmatprep.subr.mxu0 0.0
        %1305 = vmatpush1.msra.mxu0 0.0
        %1306 = vmatprep.subr.mxu0 0.0
        %1307 = vmatpush1.msra.mxu0 0.0
        %1308 = vmatprep.subr.mxu0 0.0
        %1309 = vmatpush1.msra.mxu0 0.0
        %1310 = vmatprep.subr.mxu0 0.0
        %1311 = vmatpush1.msra.mxu0 0.0
        %1312 = vmatprep.subr.mxu0 0.0
        %1313 = vmatpush1.msra.mxu0 0.0
        %1314 = vmatprep.subr.mxu0 0.0
        %1315 = vmatpush1.msra.mxu0 0.0
        %1316 = vmatprep.subr.mxu0 0.0
        %1317 = vmatpush1.msra.mxu0 0.0
        %1318 = vmatprep.subr.mxu0 0.0
        %1319 = vmatpush1.msra.mxu0 0.0
        %1320 = vmatprep.subr.mxu0 0.0
        %1321 = vmatpush1.msra.mxu0 0.0
        %1322 = vmatprep.subr.mxu0 0.0
        %1323 = vmatpush1.msra.mxu0 0.0
        %1324 = vmatprep.subr.mxu0 0.0
        %1325 = vmatpush1.msra.mxu0 0.0
        %1326 = vmatprep.subr.mxu0 0.0
        %1327 = vmatpush1.msra.mxu0 0.0
        %1328 = vmatprep.subr.mxu0 0.0
        %1329 = vmatpush1.msra.mxu0 0.0
        %1330 = vmatprep.subr.mxu0 0.0
        %1331 = vmatpush1.msra.mxu0 0.0
        %1332 = vmatprep.subr.mxu0 0.0
        %1333 = vmatpush1.msra.mxu0 0.0
        %1334 = vmatprep.subr.mxu0 0.0
        %1335 = vmatpush1.msra.mxu0 0.0
        %1336 = vmatprep.subr.mxu0 0.0
        %1337 = vmatpush1.msra.mxu0 0.0
        %1338 = vmatprep.subr.mxu0 0.0
        %1339 = vmatpush1.msra.mxu0 0.0
        %1340 = vmatprep.subr.mxu0 0.0
        %1341 = vmatpush1.msra.mxu0 0.0
        %1342 = vmatprep.subr.mxu0 0.0
        %1343 = vmatpush1.msra.mxu0 0.0
        %1344 = vmatprep.subr.mxu0 0.0
        %1345 = vmatpush1.msra.mxu0 0.0
        %1346 = vmatprep.subr.mxu0 0.0
        %1347 = vmatpush1.msra.mxu0 0.0
        %1348 = vmatprep.subr.mxu0 0.0
        %1349 = vmatpush1.msra.mxu0 0.0
        %1350 = vmatprep.subr.mxu0 0.0
        %1351 = vmatpush1.msra.mxu0 0.0
        %1352 = vmatprep.subr.mxu0 0.0
        %1353 = vmatpush1.msra.mxu0 0.0
        %1354 = vmatprep.mubr.f32.mxu0 0.0
        %1355 = vmatmul.mubr.f32.gmra.mrb[0].mxu0 %v1288
        %v1356 = vpop.f32.mrb[0].mxu0
        %v1357 = vadd.f32 %v1284, %v1356
        %v1358 = vpop.f32.mrb[0].mxu0
        %1359 = vdwg.mxu0
        %1360 = vrot.lane.b32.xlu0 %v877, 112
        %v1361 = vpop.permute.xlu0 %1360
        %1362 = vrot.lane.b32.xlu0 %v877, 80
        %v1363 = vpop.permute.xlu0 %1362
        %v1364 = vsel %vm883, %v1361, 0
        %v1366 = vsel %vm883, %v1363, 0
        %1368 = vmatprep.subr.mxu0 0.0
        %1369 = vmatpush1.xpose.msra.mxu0 %v1366
        %1370 = vmatprep.subr.mxu0 0.0
        %1371 = vmatpush1.xpose.msra.mxu0 0.0
        %1372 = vmatprep.subr.mxu0 0.0
        %1373 = vmatpush1.xpose.msra.mxu0 0.0
        %1374 = vmatprep.subr.mxu0 0.0
        %1375 = vmatpush1.xpose.msra.mxu0 0.0
        %1376 = vmatprep.subr.mxu0 0.0
        %1377 = vmatpush1.xpose.msra.mxu0 0.0
        %1378 = vmatprep.subr.mxu0 0.0
        %1379 = vmatpush1.xpose.msra.mxu0 0.0
        %1380 = vmatprep.subr.mxu0 0.0
        %1381 = vmatpush1.xpose.msra.mxu0 0.0
        %1382 = vmatprep.subr.mxu0 0.0
        %1383 = vmatpush1.xpose.msra.mxu0 0.0
        %1384 = vmatprep.subr.mxu0 0.0
        %1385 = vmatpush1.xpose.msra.mxu0 0.0
        %1386 = vmatprep.subr.mxu0 0.0
        %1387 = vmatpush1.xpose.msra.mxu0 0.0
        %1388 = vmatprep.subr.mxu0 0.0
        %1389 = vmatpush1.xpose.msra.mxu0 0.0
        %1390 = vmatprep.subr.mxu0 0.0
        %1391 = vmatpush1.xpose.msra.mxu0 0.0
        %1392 = vmatprep.subr.mxu0 0.0
        %1393 = vmatpush1.xpose.msra.mxu0 0.0
        %1394 = vmatprep.subr.mxu0 0.0
        %1395 = vmatpush1.xpose.msra.mxu0 0.0
        %1396 = vmatprep.subr.mxu0 0.0
        %1397 = vmatpush1.xpose.msra.mxu0 0.0
        %1398 = vmatprep.subr.mxu0 0.0
        %1399 = vmatpush1.xpose.msra.mxu0 0.0
        %1400 = vmatprep.subr.mxu0 0.0
        %1401 = vmatpush1.xpose.msra.mxu0 0.0
        %1402 = vmatprep.subr.mxu0 0.0
        %1403 = vmatpush1.xpose.msra.mxu0 0.0
        %1404 = vmatprep.subr.mxu0 0.0
        %1405 = vmatpush1.xpose.msra.mxu0 0.0
        %1406 = vmatprep.subr.mxu0 0.0
        %1407 = vmatpush1.xpose.msra.mxu0 0.0
        %1408 = vmatprep.subr.mxu0 0.0
        %1409 = vmatpush1.xpose.msra.mxu0 0.0
        %1410 = vmatprep.subr.mxu0 0.0
        %1411 = vmatpush1.xpose.msra.mxu0 0.0
        %1412 = vmatprep.subr.mxu0 0.0
        %1413 = vmatpush1.xpose.msra.mxu0 0.0
        %1414 = vmatprep.subr.mxu0 0.0
        %1415 = vmatpush1.xpose.msra.mxu0 0.0
        %1416 = vmatprep.subr.mxu0 0.0
        %1417 = vmatpush1.xpose.msra.mxu0 0.0
        %1418 = vmatprep.subr.mxu0 0.0
        %1419 = vmatpush1.xpose.msra.mxu0 0.0
        %1420 = vmatprep.subr.mxu0 0.0
        %1421 = vmatpush1.xpose.msra.mxu0 0.0
        %1422 = vmatprep.subr.mxu0 0.0
        %1423 = vmatpush1.xpose.msra.mxu0 0.0
        %1424 = vmatprep.subr.mxu0 0.0
        %1425 = vmatpush1.xpose.msra.mxu0 0.0
        %1426 = vmatprep.subr.mxu0 0.0
        %1427 = vmatpush1.xpose.msra.mxu0 0.0
        %1428 = vmatprep.subr.mxu0 0.0
        %1429 = vmatpush1.xpose.msra.mxu0 0.0
        %1430 = vmatprep.subr.mxu0 0.0
        %1431 = vmatpush1.xpose.msra.mxu0 0.0
        %1432 = vmatprep.mubr.f32.mxu0 0.0
        %1433 = vmatmul.mubr.f32.gmra.mrb[0].mxu0 %v1364
        %v1434 = vpop.f32.mrb[0].mxu0
        %v1435 = vadd.f32 0.0, %v1434
        %v1436 = vpop.f32.mrb[0].mxu0
        %1437 = vdwg.mxu0
        %v1438 = vmul.f32 %v1435, 0.35355338
        %v1439 = vsel %vm883, %v1438, -inf
        %1440 = vmax.xlane.f32.xlu0 %v1439
        %v1441 = vpop.xlane.xlu0 %1440
        %v1442 = vsub.f32 %v1438, %v1441
        %v1443 = vmul.f32 %v1442, 1.442695
        %v1444 = vpow.pop %v1443
        %v1445 = vsel %vm883, %v1444, 0.0
        %1446 = vadd.xlane.f32.xlu0 %v1445
        %v1447 = vpop.xlane.xlu0 %1446
        %v1448 = vrcp.pop %v1447
        %v1449 = vmul.f32 %v1444, %v1448
        %1450 = vrot.lane.b32.xlu0 %v877, 48
        %v1451 = vpop.permute.xlu0 %1450
        %v1454 = vsel %vm883, %v1449, 0
        %1456 = vmatprep.subr.mxu0 0.0
        %1457 = vmatpush1.msra.mxu0 %v1451
        %1458 = vmatprep.subr.mxu0 0.0
        %1459 = vmatpush1.msra.mxu0 0.0
        %1460 = vmatprep.subr.mxu0 0.0
        %1461 = vmatpush1.msra.mxu0 0.0
        %1462 = vmatprep.subr.mxu0 0.0
        %1463 = vmatpush1.msra.mxu0 0.0
        %1464 = vmatprep.subr.mxu0 0.0
        %1465 = vmatpush1.msra.mxu0 0.0
        %1466 = vmatprep.subr.mxu0 0.0
        %1467 = vmatpush1.msra.mxu0 0.0
        %1468 = vmatprep.subr.mxu0 0.0
        %1469 = vmatpush1.msra.mxu0 0.0
        %1470 = vmatprep.subr.mxu0 0.0
        %1471 = vmatpush1.msra.mxu0 0.0
        %1472 = vmatprep.subr.mxu0 0.0
        %1473 = vmatpush1.msra.mxu0 0.0
        %1474 = vmatprep.subr.mxu0 0.0
        %1475 = vmatpush1.msra.mxu0 0.0
        %1476 = vmatprep.subr.mxu0 0.0
        %1477 = vmatpush1.msra.mxu0 0.0
        %1478 = vmatprep.subr.mxu0 0.0
        %1479 = vmatpush1.msra.mxu0 0.0
        %1480 = vmatprep.subr.mxu0 0.0
        %1481 = vmatpush1.msra.mxu0 0.0
        %1482 = vmatprep.subr.mxu0 0.0
        %1483 = vmatpush1.msra.mxu0 0.0
        %1484 = vmatprep.subr.mxu0 0.0
        %1485 = vmatpush1.msra.mxu0 0.0
        %1486 = vmatprep.subr.mxu0 0.0
        %1487 = vmatpush1.msra.mxu0 0.0
        %1488 = vmatprep.subr.mxu0 0.0
        %1489 = vmatpush1.msra.mxu0 0.0
        %1490 = vmatprep.subr.mxu0 0.0
        %1491 = vmatpush1.msra.mxu0 0.0
        %1492 = vmatprep.subr.mxu0 0.0
        %1493 = vmatpush1.msra.mxu0 0.0
        %1494 = vmatprep.subr.mxu0 0.0
        %1495 = vmatpush1.msra.mxu0 0.0
        %1496 = vmatprep.subr.mxu0 0.0
        %1497 = vmatpush1.msra.mxu0 0.0
        %1498 = vmatprep.subr.mxu0 0.0
        %1499 = vmatpush1.msra.mxu0 0.0
        %1500 = vmatprep.subr.mxu0 0.0
        %1501 = vmatpush1.msra.mxu0 0.0
        %1502 = vmatprep.subr.mxu0 0.0
        %1503 = vmatpush1.msra.mxu0 0.0
        %1504 = vmatprep.subr.mxu0 0.0
        %1505 = vmatpush1.msra.mxu0 0.0
        %1506 = vmatprep.subr.mxu0 0.0
        %1507 = vmatpush1.msra.mxu0 0.0
        %1508 = vmatprep.subr.mxu0 0.0
        %1509 = vmatpush1.msra.mxu0 0.0
        %1510 = vmatprep.subr.mxu0 0.0
        %1511 = vmatpush1.msra.mxu0 0.0
        %1512 = vmatprep.subr.mxu0 0.0
        %1513 = vmatpush1.msra.mxu0 0.0
        %1514 = vmatprep.subr.mxu0 0.0
        %1515 = vmatpush1.msra.mxu0 0.0
        %1516 = vmatprep.subr.mxu0 0.0
        %1517 = vmatpush1.msra.mxu0 0.0
        %1518 = vmatprep.subr.mxu0 0.0
        %1519 = vmatpush1.msra.mxu0 0.0
        %1520 = vmatprep.mubr.f32.mxu0 0.0
        %1521 = vmatmul.mubr.f32.gmra.mrb[0].mxu0 %v1454
        %v1522 = vpop.f32.mrb[0].mxu0
        %v1523 = vadd.f32 0.0, %v1522
        %v1524 = vpop.f32.mrb[0].mxu0
        %1525 = vdwg.mxu0
        %v1526 = vld [vmem:[#allocation13 + $0x10] sm:$0xff]
        %v1528 = vsel %vm883, %v1523, 0
        %1530 = vmatprep.subr.mxu0 0.0
        %1531 = vmatpush1.msra.mxu0 %v1526
        %1532 = vmatprep.subr.mxu0 0.0
        %1533 = vmatpush1.msra.mxu0 0.0
        %1534 = vmatprep.subr.mxu0 0.0
        %1535 = vmatpush1.msra.mxu0 0.0
        %1536 = vmatprep.subr.mxu0 0.0
        %1537 = vmatpush1.msra.mxu0 0.0
        %1538 = vmatprep.subr.mxu0 0.0
        %1539 = vmatpush1.msra.mxu0 0.0
        %1540 = vmatprep.subr.mxu0 0.0
        %1541 = vmatpush1.msra.mxu0 0.0
        %1542 = vmatprep.subr.mxu0 0.0
        %1543 = vmatpush1.msra.mxu0 0.0
        %1544 = vmatprep.subr.mxu0 0.0
        %1545 = vmatpush1.msra.mxu0 0.0
        %1546 = vmatprep.subr.mxu0 0.0
        %1547 = vmatpush1.msra.mxu0 0.0
        %1548 = vmatprep.subr.mxu0 0.0
        %1549 = vmatpush1.msra.mxu0 0.0
        %1550 = vmatprep.subr.mxu0 0.0
        %1551 = vmatpush1.msra.mxu0 0.0
        %1552 = vmatprep.subr.mxu0 0.0
        %1553 = vmatpush1.msra.mxu0 0.0
        %1554 = vmatprep.subr.mxu0 0.0
        %1555 = vmatpush1.msra.mxu0 0.0
        %1556 = vmatprep.subr.mxu0 0.0
        %1557 = vmatpush1.msra.mxu0 0.0
        %1558 = vmatprep.subr.mxu0 0.0
        %1559 = vmatpush1.msra.mxu0 0.0
        %1560 = vmatprep.subr.mxu0 0.0
        %1561 = vmatpush1.msra.mxu0 0.0
        %1562 = vmatprep.subr.mxu0 0.0
        %1563 = vmatpush1.msra.mxu0 0.0
        %1564 = vmatprep.subr.mxu0 0.0
        %1565 = vmatpush1.msra.mxu0 0.0
        %1566 = vmatprep.subr.mxu0 0.0
        %1567 = vmatpush1.msra.mxu0 0.0
        %1568 = vmatprep.subr.mxu0 0.0
        %1569 = vmatpush1.msra.mxu0 0.0
        %1570 = vmatprep.subr.mxu0 0.0
        %1571 = vmatpush1.msra.mxu0 0.0
        %1572 = vmatprep.subr.mxu0 0.0
        %1573 = vmatpush1.msra.mxu0 0.0
        %1574 = vmatprep.subr.mxu0 0.0
        %1575 = vmatpush1.msra.mxu0 0.0
        %1576 = vmatprep.subr.mxu0 0.0
        %1577 = vmatpush1.msra.mxu0 0.0
        %1578 = vmatprep.subr.mxu0 0.0
        %1579 = vmatpush1.msra.mxu0 0.0
        %1580 = vmatprep.subr.mxu0 0.0
        %1581 = vmatpush1.msra.mxu0 0.0
        %1582 = vmatprep.subr.mxu0 0.0
        %1583 = vmatpush1.msra.mxu0 0.0
        %1584 = vmatprep.subr.mxu0 0.0
        %1585 = vmatpush1.msra.mxu0 0.0
        %1586 = vmatprep.subr.mxu0 0.0
        %1587 = vmatpush1.msra.mxu0 0.0
        %1588 = vmatprep.subr.mxu0 0.0
        %1589 = vmatpush1.msra.mxu0 0.0
        %1590 = vmatprep.subr.mxu0 0.0
        %1591 = vmatpush1.msra.mxu0 0.0
        %1592 = vmatprep.subr.mxu0 0.0
        %1593 = vmatpush1.msra.mxu0 0.0
        %1594 = vmatprep.mubr.f32.mxu0 0.0
        %1595 = vmatmul.mubr.f32.gmra.mrb[0].mxu0 %v1528
        %v1596 = vpop.f32.mrb[0].mxu0
        %v1597 = vadd.f32 0.0, %v1596
        %v1598 = vpop.f32.mrb[0].mxu0
        %1599 = vdwg.mxu0
        %v1600 = vadd.f32 %v1357, %v1597
        %1601 = vrot.lane.b32.xlu0 %v877, 104
        %v1602 = vpop.permute.xlu0 %1601
        %1603 = vrot.lane.b32.xlu0 %v877, 72
        %v1604 = vpop.permute.xlu0 %1603
        %v1605 = vsel %vm883, %v1602, 0
        %v1607 = vsel %vm883, %v1604, 0
        %1609 = vmatprep.subr.mxu0 0.0
        %1610 = vmatpush1.xpose.msra.mxu0 %v1607
        %1611 = vmatprep.subr.mxu0 0.0
        %1612 = vmatpush1.xpose.msra.mxu0 0.0
        %1613 = vmatprep.subr.mxu0 0.0
        %1614 = vmatpush1.xpose.msra.mxu0 0.0
        %1615 = vmatprep.subr.mxu0 0.0
        %1616 = vmatpush1.xpose.msra.mxu0 0.0
        %1617 = vmatprep.subr.mxu0 0.0
        %1618 = vmatpush1.xpose.msra.mxu0 0.0
        %1619 = vmatprep.subr.mxu0 0.0
        %1620 = vmatpush1.xpose.msra.mxu0 0.0
        %1621 = vmatprep.subr.mxu0 0.0
        %1622 = vmatpush1.xpose.msra.mxu0 0.0
        %1623 = vmatprep.subr.mxu0 0.0
        %1624 = vmatpush1.xpose.msra.mxu0 0.0
        %1625 = vmatprep.subr.mxu0 0.0
        %1626 = vmatpush1.xpose.msra.mxu0 0.0
        %1627 = vmatprep.subr.mxu0 0.0
        %1628 = vmatpush1.xpose.msra.mxu0 0.0
        %1629 = vmatprep.subr.mxu0 0.0
        %1630 = vmatpush1.xpose.msra.mxu0 0.0
        %1631 = vmatprep.subr.mxu0 0.0
        %1632 = vmatpush1.xpose.msra.mxu0 0.0
        %1633 = vmatprep.subr.mxu0 0.0
        %1634 = vmatpush1.xpose.msra.mxu0 0.0
        %1635 = vmatprep.subr.mxu0 0.0
        %1636 = vmatpush1.xpose.msra.mxu0 0.0
        %1637 = vmatprep.subr.mxu0 0.0
        %1638 = vmatpush1.xpose.msra.mxu0 0.0
        %1639 = vmatprep.subr.mxu0 0.0
        %1640 = vmatpush1.xpose.msra.mxu0 0.0
        %1641 = vmatprep.subr.mxu0 0.0
        %1642 = vmatpush1.xpose.msra.mxu0 0.0
        %1643 = vmatprep.subr.mxu0 0.0
        %1644 = vmatpush1.xpose.msra.mxu0 0.0
        %1645 = vmatprep.subr.mxu0 0.0
        %1646 = vmatpush1.xpose.msra.mxu0 0.0
        %1647 = vmatprep.subr.mxu0 0.0
        %1648 = vmatpush1.xpose.msra.mxu0 0.0
        %1649 = vmatprep.subr.mxu0 0.0
        %1650 = vmatpush1.xpose.msra.mxu0 0.0
        %1651 = vmatprep.subr.mxu0 0.0
        %1652 = vmatpush1.xpose.msra.mxu0 0.0
        %1653 = vmatprep.subr.mxu0 0.0
        %1654 = vmatpush1.xpose.msra.mxu0 0.0
        %1655 = vmatprep.subr.mxu0 0.0
        %1656 = vmatpush1.xpose.msra.mxu0 0.0
        %1657 = vmatprep.subr.mxu0 0.0
        %1658 = vmatpush1.xpose.msra.mxu0 0.0
        %1659 = vmatprep.subr.mxu0 0.0
        %1660 = vmatpush1.xpose.msra.mxu0 0.0
        %1661 = vmatprep.subr.mxu0 0.0
        %1662 = vmatpush1.xpose.msra.mxu0 0.0
        %1663 = vmatprep.subr.mxu0 0.0
        %1664 = vmatpush1.xpose.msra.mxu0 0.0
        %1665 = vmatprep.subr.mxu0 0.0
        %1666 = vmatpush1.xpose.msra.mxu0 0.0
        %1667 = vmatprep.subr.mxu0 0.0
        %1668 = vmatpush1.xpose.msra.mxu0 0.0
        %1669 = vmatprep.subr.mxu0 0.0
        %1670 = vmatpush1.xpose.msra.mxu0 0.0
        %1671 = vmatprep.subr.mxu0 0.0
        %1672 = vmatpush1.xpose.msra.mxu0 0.0
        %1673 = vmatprep.mubr.f32.mxu0 0.0
        %1674 = vmatmul.mubr.f32.gmra.mrb[0].mxu0 %v1605
        %v1675 = vpop.f32.mrb[0].mxu0
        %v1676 = vadd.f32 0.0, %v1675
        %v1677 = vpop.f32.mrb[0].mxu0
        %1678 = vdwg.mxu0
        %v1679 = vmul.f32 %v1676, 0.35355338
        %v1680 = vsel %vm883, %v1679, -inf
        %1681 = vmax.xlane.f32.xlu0 %v1680
        %v1682 = vpop.xlane.xlu0 %1681
        %v1683 = vsub.f32 %v1679, %v1682
        %v1684 = vmul.f32 %v1683, 1.442695
        %v1685 = vpow.pop %v1684
        %v1686 = vsel %vm883, %v1685, 0.0
        %1687 = vadd.xlane.f32.xlu0 %v1686
        %v1688 = vpop.xlane.xlu0 %1687
        %v1689 = vrcp.pop %v1688
        %v1690 = vmul.f32 %v1685, %v1689
        %1691 = vrot.lane.b32.xlu0 %v877, 40
        %v1692 = vpop.permute.xlu0 %1691
        %v1695 = vsel %vm883, %v1690, 0
        %1697 = vmatprep.subr.mxu0 0.0
        %1698 = vmatpush1.msra.mxu0 %v1692
        %1699 = vmatprep.subr.mxu0 0.0
        %1700 = vmatpush1.msra.mxu0 0.0
        %1701 = vmatprep.subr.mxu0 0.0
        %1702 = vmatpush1.msra.mxu0 0.0
        %1703 = vmatprep.subr.mxu0 0.0
        %1704 = vmatpush1.msra.mxu0 0.0
        %1705 = vmatprep.subr.mxu0 0.0
        %1706 = vmatpush1.msra.mxu0 0.0
        %1707 = vmatprep.subr.mxu0 0.0
        %1708 = vmatpush1.msra.mxu0 0.0
        %1709 = vmatprep.subr.mxu0 0.0
        %1710 = vmatpush1.msra.mxu0 0.0
        %1711 = vmatprep.subr.mxu0 0.0
        %1712 = vmatpush1.msra.mxu0 0.0
        %1713 = vmatprep.subr.mxu0 0.0
        %1714 = vmatpush1.msra.mxu0 0.0
        %1715 = vmatprep.subr.mxu0 0.0
        %1716 = vmatpush1.msra.mxu0 0.0
        %1717 = vmatprep.subr.mxu0 0.0
        %1718 = vmatpush1.msra.mxu0 0.0
        %1719 = vmatprep.subr.mxu0 0.0
        %1720 = vmatpush1.msra.mxu0 0.0
        %1721 = vmatprep.subr.mxu0 0.0
        %1722 = vmatpush1.msra.mxu0 0.0
        %1723 = vmatprep.subr.mxu0 0.0
        %1724 = vmatpush1.msra.mxu0 0.0
        %1725 = vmatprep.subr.mxu0 0.0
        %1726 = vmatpush1.msra.mxu0 0.0
        %1727 = vmatprep.subr.mxu0 0.0
        %1728 = vmatpush1.msra.mxu0 0.0
        %1729 = vmatprep.subr.mxu0 0.0
        %1730 = vmatpush1.msra.mxu0 0.0
        %1731 = vmatprep.subr.mxu0 0.0
        %1732 = vmatpush1.msra.mxu0 0.0
        %1733 = vmatprep.subr.mxu0 0.0
        %1734 = vmatpush1.msra.mxu0 0.0
        %1735 = vmatprep.subr.mxu0 0.0
        %1736 = vmatpush1.msra.mxu0 0.0
        %1737 = vmatprep.subr.mxu0 0.0
        %1738 = vmatpush1.msra.mxu0 0.0
        %1739 = vmatprep.subr.mxu0 0.0
        %1740 = vmatpush1.msra.mxu0 0.0
        %1741 = vmatprep.subr.mxu0 0.0
        %1742 = vmatpush1.msra.mxu0 0.0
        %1743 = vmatprep.subr.mxu0 0.0
        %1744 = vmatpush1.msra.mxu0 0.0
        %1745 = vmatprep.subr.mxu0 0.0
        %1746 = vmatpush1.msra.mxu0 0.0
        %1747 = vmatprep.subr.mxu0 0.0
        %1748 = vmatpush1.msra.mxu0 0.0
        %1749 = vmatprep.subr.mxu0 0.0
        %1750 = vmatpush1.msra.mxu0 0.0
        %1751 = vmatprep.subr.mxu0 0.0
        %1752 = vmatpush1.msra.mxu0 0.0
        %1753 = vmatprep.subr.mxu0 0.0
        %1754 = vmatpush1.msra.mxu0 0.0
        %1755 = vmatprep.subr.mxu0 0.0
        %1756 = vmatpush1.msra.mxu0 0.0
        %1757 = vmatprep.subr.mxu0 0.0
        %1758 = vmatpush1.msra.mxu0 0.0
        %1759 = vmatprep.subr.mxu0 0.0
        %1760 = vmatpush1.msra.mxu0 0.0
        %1761 = vmatprep.mubr.f32.mxu0 0.0
        %1762 = vmatmul.mubr.f32.gmra.mrb[0].mxu0 %v1695
        %v1763 = vpop.f32.mrb[0].mxu0
        %v1764 = vadd.f32 0.0, %v1763
        %v1765 = vpop.f32.mrb[0].mxu0
        %1766 = vdwg.mxu0
        %v1767 = vld [vmem:[#allocation13 + $0x18] sm:$0xff]
        %v1769 = vsel %vm883, %v1764, 0
        %1771 = vmatprep.subr.mxu0 0.0
        %1772 = vmatpush1.msra.mxu0 %v1767
        %1773 = vmatprep.subr.mxu0 0.0
        %1774 = vmatpush1.msra.mxu0 0.0
        %1775 = vmatprep.subr.mxu0 0.0
        %1776 = vmatpush1.msra.mxu0 0.0
        %1777 = vmatprep.subr.mxu0 0.0
        %1778 = vmatpush1.msra.mxu0 0.0
        %1779 = vmatprep.subr.mxu0 0.0
        %1780 = vmatpush1.msra.mxu0 0.0
        %1781 = vmatprep.subr.mxu0 0.0
        %1782 = vmatpush1.msra.mxu0 0.0
        %1783 = vmatprep.subr.mxu0 0.0
        %1784 = vmatpush1.msra.mxu0 0.0
        %1785 = vmatprep.subr.mxu0 0.0
        %1786 = vmatpush1.msra.mxu0 0.0
        %1787 = vmatprep.subr.mxu0 0.0
        %1788 = vmatpush1.msra.mxu0 0.0
        %1789 = vmatprep.subr.mxu0 0.0
        %1790 = vmatpush1.msra.mxu0 0.0
        %1791 = vmatprep.subr.mxu0 0.0
        %1792 = vmatpush1.msra.mxu0 0.0
        %1793 = vmatprep.subr.mxu0 0.0
        %1794 = vmatpush1.msra.mxu0 0.0
        %1795 = vmatprep.subr.mxu0 0.0
        %1796 = vmatpush1.msra.mxu0 0.0
        %1797 = vmatprep.subr.mxu0 0.0
        %1798 = vmatpush1.msra.mxu0 0.0
        %1799 = vmatprep.subr.mxu0 0.0
        %1800 = vmatpush1.msra.mxu0 0.0
        %1801 = vmatprep.subr.mxu0 0.0
        %1802 = vmatpush1.msra.mxu0 0.0
        %1803 = vmatprep.subr.mxu0 0.0
        %1804 = vmatpush1.msra.mxu0 0.0
        %1805 = vmatprep.subr.mxu0 0.0
        %1806 = vmatpush1.msra.mxu0 0.0
        %1807 = vmatprep.subr.mxu0 0.0
        %1808 = vmatpush1.msra.mxu0 0.0
        %1809 = vmatprep.subr.mxu0 0.0
        %1810 = vmatpush1.msra.mxu0 0.0
        %1811 = vmatprep.subr.mxu0 0.0
        %1812 = vmatpush1.msra.mxu0 0.0
        %1813 = vmatprep.subr.mxu0 0.0
        %1814 = vmatpush1.msra.mxu0 0.0
        %1815 = vmatprep.subr.mxu0 0.0
        %1816 = vmatpush1.msra.mxu0 0.0
        %1817 = vmatprep.subr.mxu0 0.0
        %1818 = vmatpush1.msra.mxu0 0.0
        %1819 = vmatprep.subr.mxu0 0.0
        %1820 = vmatpush1.msra.mxu0 0.0
        %1821 = vmatprep.subr.mxu0 0.0
        %1822 = vmatpush1.msra.mxu0 0.0
        %1823 = vmatprep.subr.mxu0 0.0
        %1824 = vmatpush1.msra.mxu0 0.0
        %1825 = vmatprep.subr.mxu0 0.0
        %1826 = vmatpush1.msra.mxu0 0.0
        %1827 = vmatprep.subr.mxu0 0.0
        %1828 = vmatpush1.msra.mxu0 0.0
        %1829 = vmatprep.subr.mxu0 0.0
        %1830 = vmatpush1.msra.mxu0 0.0
        %1831 = vmatprep.subr.mxu0 0.0
        %1832 = vmatpush1.msra.mxu0 0.0
        %1833 = vmatprep.subr.mxu0 0.0
        %1834 = vmatpush1.msra.mxu0 0.0
        %1835 = vmatprep.mubr.f32.mxu0 0.0
        %1836 = vmatmul.mubr.f32.gmra.mrb[0].mxu0 %v1769
        %v1837 = vpop.f32.mrb[0].mxu0
        %v1838 = vadd.f32 0.0, %v1837
        %v1839 = vpop.f32.mrb[0].mxu0
        %1840 = vdwg.mxu0
        %v1841 = vadd.f32 %v1600, %v1838
        %v1842 = vadd.f32 %v679, %v1841
        %v1843 = vld [vmem:[#allocation14] sm:$0x1]
        %v1845 = vlaneseq
        %v1846 = vshrl.u32 %v1845, 7
        %v1847 = vsub.s32 0, %v1846
        %v1848 = vrot.slane %v1843, %v1847
        %v1850 = vadd.f32 %v1842, %v1848
        %v1851 = vld [vmem:[#allocation16] sm:$0xff]
        %v1852 = vld [vmem:[#allocation16 + $0x8] sm:$0xff]
        %v1853 = vld [vmem:[#allocation16 + $0x10] sm:$0xff]
        %v1854 = vld [vmem:[#allocation16 + $0x18] sm:$0xff]
        %v1855 = vld [vmem:[#allocation17] sm:$0x1]
        %1856 = vmatprep.subr.mxu0 0.0
        %1857 = vmatpush1.msra.mxu0 %v1851
        %1858 = vmatprep.subr.mxu0 0.0
        %1859 = vmatpush1.msra.mxu0 %v1852
        %1860 = vmatprep.subr.mxu0 0.0
        %1861 = vmatpush1.msra.mxu0 %v1853
        %1862 = vmatprep.subr.mxu0 0.0
        %1863 = vmatpush1.msra.mxu0 %v1854
        %1864 = vmatprep.subr.mxu0 0.0
        %1865 = vmatpush1.msra.mxu0 0.0
        %1866 = vmatprep.subr.mxu0 0.0
        %1867 = vmatpush1.msra.mxu0 0.0
        %1868 = vmatprep.subr.mxu0 0.0
        %1869 = vmatpush1.msra.mxu0 0.0
        %1870 = vmatprep.subr.mxu0 0.0
        %1871 = vmatpush1.msra.mxu0 0.0
        %1872 = vmatprep.subr.mxu0 0.0
        %1873 = vmatpush1.msra.mxu0 0.0
        %1874 = vmatprep.subr.mxu0 0.0
        %1875 = vmatpush1.msra.mxu0 0.0
        %1876 = vmatprep.subr.mxu0 0.0
        %1877 = vmatpush1.msra.mxu0 0.0
        %1878 = vmatprep.subr.mxu0 0.0
        %1879 = vmatpush1.msra.mxu0 0.0
        %1880 = vmatprep.subr.mxu0 0.0
        %1881 = vmatpush1.msra.mxu0 0.0
        %1882 = vmatprep.subr.mxu0 0.0
        %1883 = vmatpush1.msra.mxu0 0.0
        %1884 = vmatprep.subr.mxu0 0.0
        %1885 = vmatpush1.msra.mxu0 0.0
        %1886 = vmatprep.subr.mxu0 0.0
        %1887 = vmatpush1.msra.mxu0 0.0
        %1888 = vmatprep.subr.mxu0 0.0
        %1889 = vmatpush1.msra.mxu0 0.0
        %1890 = vmatprep.subr.mxu0 0.0
        %1891 = vmatpush1.msra.mxu0 0.0
        %1892 = vmatprep.subr.mxu0 0.0
        %1893 = vmatpush1.msra.mxu0 0.0
        %1894 = vmatprep.subr.mxu0 0.0
        %1895 = vmatpush1.msra.mxu0 0.0
        %1896 = vmatprep.subr.mxu0 0.0
        %1897 = vmatpush1.msra.mxu0 0.0
        %1898 = vmatprep.subr.mxu0 0.0
        %1899 = vmatpush1.msra.mxu0 0.0
        %1900 = vmatprep.subr.mxu0 0.0
        %1901 = vmatpush1.msra.mxu0 0.0
        %1902 = vmatprep.subr.mxu0 0.0
        %1903 = vmatpush1.msra.mxu0 0.0
        %1904 = vmatprep.subr.mxu0 0.0
        %1905 = vmatpush1.msra.mxu0 0.0
        %1906 = vmatprep.subr.mxu0 0.0
        %1907 = vmatpush1.msra.mxu0 0.0
        %1908 = vmatprep.subr.mxu0 0.0
        %1909 = vmatpush1.msra.mxu0 0.0
        %1910 = vmatprep.subr.mxu0 0.0
        %1911 = vmatpush1.msra.mxu0 0.0
        %1912 = vmatprep.subr.mxu0 0.0
        %1913 = vmatpush1.msra.mxu0 0.0
        %1914 = vmatprep.subr.mxu0 0.0
        %1915 = vmatpush1.msra.mxu0 0.0
        %1916 = vmatprep.subr.mxu0 0.0
        %1917 = vmatpush1.msra.mxu0 0.0
        %1918 = vmatprep.subr.mxu0 0.0
        %1919 = vmatpush1.msra.mxu0 0.0
        %1920 = vmatprep.mubr.f32.mxu0 0.0
        %1921 = vmatmul.mubr.f32.gmra.mrb[0].mxu0 %v695
        %v1922 = vpop.f32.mrb[0].mxu0
        %v1923 = vadd.f32 %v1855, %v1922
        %v1924 = vpop.f32.mrb[0].mxu0
        %1925 = vdwg.mxu0
        %v1926 = vsel %vm693, %v1850, 0.0
        %1927 = vadd.xlane.f32.xlu0 %v1926
        %v1928 = vpop.xlane.xlu0 %1927
        %v1929 = vmul.f32 %v1928, %v770
        %v1930 = vsub.f32 %v1850, %v1929
        %v1931 = vmul.f32 %v1930, %v1930
        %v1932 = vsel %vm693, %v1931, 0.0
        %1933 = vadd.xlane.f32.xlu0 %v1932
        %v1934 = vpop.xlane.xlu0 %1933
        %v1935 = vmul.f32 %v1934, %v770
        %v1936 = vadd.f32 %v1935, 1e-05
        %v1937 = vrsqrt.pop %v1936
        %v1938 = vmul.f32 %v1930, %v1937
        %v1939 = vadd.f32 %v1923, 1.0
        %v1940 = vlaneseq
        %v1941 = vshrl.u32 %v1940, 7
        %v1942 = vsub.s32 0, %v1941
        %v1943 = vrot.slane %v1939, %v1942
        %v1944 = vmul.f32 %v1938, %v1943
        %v1945 = vlaneseq
        %v1946 = vshrl.u32 %v1945, 7
        %v1947 = vsub.s32 0, %v1946
        %v1948 = vrot.slane %v1923, %v1947
        %1950 = vrot.lane.b32.xlu0 %v1948, 96
        %v1951 = vpop.permute.xlu0 %1950
        %v1953 = vadd.f32 %v1944, %v1951
        %v1954 = vld [vmem:[#allocation19] sm:$0xff]
        %v1955 = vld [vmem:[#allocation19 + $0x8] sm:$0xff]
        %v1956 = vld [vmem:[#allocation19 + $0x10] sm:$0xff]
        %v1957 = vld [vmem:[#allocation19 + $0x18] sm:$0xff]
        %v1958 = vld [vmem:[#allocation20] sm:$0x1]
        %v1960 = vlaneseq
        %v1961 = vshrl.u32 %v1960, 7
        %v1962 = vsub.s32 0, %v1961
        %v1963 = vrot.slane %v1958, %v1962
        %v1966 = vsel %vm693, %v1953, 0
        %1968 = vmatprep.subr.mxu0 0.0
        %1969 = vmatpush1.msra.mxu0 %v1954
        %1970 = vmatprep.subr.mxu0 0.0
        %1971 = vmatpush1.msra.mxu0 %v1955
        %1972 = vmatprep.subr.mxu0 0.0
        %1973 = vmatpush1.msra.mxu0 %v1956
        %1974 = vmatprep.subr.mxu0 0.0
        %1975 = vmatpush1.msra.mxu0 %v1957
        %1976 = vmatprep.subr.mxu0 0.0
        %1977 = vmatpush1.msra.mxu0 0.0
        %1978 = vmatprep.subr.mxu0 0.0
        %1979 = vmatpush1.msra.mxu0 0.0
        %1980 = vmatprep.subr.mxu0 0.0
        %1981 = vmatpush1.msra.mxu0 0.0
        %1982 = vmatprep.subr.mxu0 0.0
        %1983 = vmatpush1.msra.mxu0 0.0
        %1984 = vmatprep.subr.mxu0 0.0
        %1985 = vmatpush1.msra.mxu0 0.0
        %1986 = vmatprep.subr.mxu0 0.0
        %1987 = vmatpush1.msra.mxu0 0.0
        %1988 = vmatprep.subr.mxu0 0.0
        %1989 = vmatpush1.msra.mxu0 0.0
        %1990 = vmatprep.subr.mxu0 0.0
        %1991 = vmatpush1.msra.mxu0 0.0
        %1992 = vmatprep.subr.mxu0 0.0
        %1993 = vmatpush1.msra.mxu0 0.0
        %1994 = vmatprep.subr.mxu0 0.0
        %1995 = vmatpush1.msra.mxu0 0.0
        %1996 = vmatprep.subr.mxu0 0.0
        %1997 = vmatpush1.msra.mxu0 0.0
        %1998 = vmatprep.subr.mxu0 0.0
        %1999 = vmatpush1.msra.mxu0 0.0
        %2000 = vmatprep.subr.mxu0 0.0
        %2001 = vmatpush1.msra.mxu0 0.0
        %2002 = vmatprep.subr.mxu0 0.0
        %2003 = vmatpush1.msra.mxu0 0.0
        %2004 = vmatprep.subr.mxu0 0.0
        %2005 = vmatpush1.msra.mxu0 0.0
        %2006 = vmatprep.subr.mxu0 0.0
        %2007 = vmatpush1.msra.mxu0 0.0
        %2008 = vmatprep.subr.mxu0 0.0
        %2009 = vmatpush1.msra.mxu0 0.0
        %2010 = vmatprep.subr.mxu0 0.0
        %2011 = vmatpush1.msra.mxu0 0.0
        %2012 = vmatprep.subr.mxu0 0.0
        %2013 = vmatpush1.msra.mxu0 0.0
        %2014 = vmatprep.subr.mxu0 0.0
        %2015 = vmatpush1.msra.mxu0 0.0
        %2016 = vmatprep.subr.mxu0 0.0
        %2017 = vmatpush1.msra.mxu0 0.0
        %2018 = vmatprep.subr.mxu0 0.0
        %2019 = vmatpush1.msra.mxu0 0.0
        %2020 = vmatprep.subr.mxu0 0.0
        %2021 = vmatpush1.msra.mxu0 0.0
        %2022 = vmatprep.subr.mxu0 0.0
        %2023 = vmatpush1.msra.mxu0 0.0
        %2024 = vmatprep.subr.mxu0 0.0
        %2025 = vmatpush1.msra.mxu0 0.0
        %2026 = vmatprep.subr.mxu0 0.0
        %2027 = vmatpush1.msra.mxu0 0.0
        %2028 = vmatprep.subr.mxu0 0.0
        %2029 = vmatpush1.msra.mxu0 0.0
        %2030 = vmatprep.subr.mxu0 0.0
        %2031 = vmatpush1.msra.mxu0 0.0
        %2032 = vmatprep.mubr.f32.mxu0 0.0
        %2033 = vmatmul.mubr.f32.gmra.mrb[0].mxu0 %v1966
        %v2034 = vpop.f32.mrb[0].mxu0
        %v2035 = vadd.f32 %v1963, %v2034
        %v2036 = vpop.f32.mrb[0].mxu0
        %2037 = vdwg.mxu0
        %v2038 = vxor.u32 %v2035, 2147483648
        %v2039 = vmul.f32 %v2038, 1.442695
        %v2040 = vpow.pop %v2039
        %v2041 = vadd.f32 %v2040, 1.0
        %v2042 = vrcp.pop %v2041
        %v2043 = vmul.f32 1.0, %v2042
        %v2044 = vmul.f32 %v2035, %v2043
        %v2045 = vld [vmem:[#allocation22] sm:$0xff]
        %v2046 = vld [vmem:[#allocation22 + $0x8] sm:$0xff]
        %v2047 = vld [vmem:[#allocation22 + $0x10] sm:$0xff]
        %v2048 = vld [vmem:[#allocation22 + $0x18] sm:$0xff]
        %v2049 = vld [vmem:[#allocation22 + $0x20] sm:$0xff]
        %v2050 = vld [vmem:[#allocation22 + $0x28] sm:$0xff]
        %v2051 = vld [vmem:[#allocation22 + $0x30] sm:$0xff]
        %v2052 = vld [vmem:[#allocation22 + $0x38] sm:$0xff]
        %v2053 = vld [vmem:[#allocation22 + $0x40] sm:$0xff]
        %v2054 = vld [vmem:[#allocation22 + $0x48] sm:$0xff]
        %v2055 = vld [vmem:[#allocation22 + $0x50] sm:$0xff]
        %v2056 = vld [vmem:[#allocation22 + $0x58] sm:$0xff]
        %v2057 = vld [vmem:[#allocation22 + $0x60] sm:$0xff]
        %v2058 = vld [vmem:[#allocation22 + $0x68] sm:$0xff]
        %v2059 = vld [vmem:[#allocation22 + $0x70] sm:$0xff]
        %v2060 = vld [vmem:[#allocation22 + $0x78] sm:$0xff]
        %v2061 = vld [vmem:[#allocation23] sm:$0x1]
        %v2063 = vlaneseq
        %v2064 = vshrl.u32 %v2063, 7
        %v2065 = vsub.s32 0, %v2064
        %v2066 = vrot.slane %v2061, %v2065
        %2068 = vmatprep.subr.mxu0 0.0
        %2069 = vmatpush1.msra.mxu0 %v2045
        %2070 = vmatprep.subr.mxu0 0.0
        %2071 = vmatpush1.msra.mxu0 %v2046
        %2072 = vmatprep.subr.mxu0 0.0
        %2073 = vmatpush1.msra.mxu0 %v2047
        %2074 = vmatprep.subr.mxu0 0.0
        %2075 = vmatpush1.msra.mxu0 %v2048
        %2076 = vmatprep.subr.mxu0 0.0
        %2077 = vmatpush1.msra.mxu0 %v2049
        %2078 = vmatprep.subr.mxu0 0.0
        %2079 = vmatpush1.msra.mxu0 %v2050
        %2080 = vmatprep.subr.mxu0 0.0
        %2081 = vmatpush1.msra.mxu0 %v2051
        %2082 = vmatprep.subr.mxu0 0.0
        %2083 = vmatpush1.msra.mxu0 %v2052
        %2084 = vmatprep.subr.mxu0 0.0
        %2085 = vmatpush1.msra.mxu0 %v2053
        %2086 = vmatprep.subr.mxu0 0.0
        %2087 = vmatpush1.msra.mxu0 %v2054
        %2088 = vmatprep.subr.mxu0 0.0
        %2089 = vmatpush1.msra.mxu0 %v2055
        %2090 = vmatprep.subr.mxu0 0.0
        %2091 = vmatpush1.msra.mxu0 %v2056
        %2092 = vmatprep.subr.mxu0 0.0
        %2093 = vmatpush1.msra.mxu0 %v2057
        %2094 = vmatprep.subr.mxu0 0.0
        %2095 = vmatpush1.msra.mxu0 %v2058
        %2096 = vmatprep.subr.mxu0 0.0
        %2097 = vmatpush1.msra.mxu0 %v2059
        %2098 = vmatprep.subr.mxu0 0.0
        %2099 = vmatpush1.msra.mxu0 %v2060
        %2100 = vmatprep.subr.mxu0 0.0
        %2101 = vmatpush1.msra.mxu0 0.0
        %2102 = vmatprep.subr.mxu0 0.0
        %2103 = vmatpush1.msra.mxu0 0.0
        %2104 = vmatprep.subr.mxu0 0.0
        %2105 = vmatpush1.msra.mxu0 0.0
        %2106 = vmatprep.subr.mxu0 0.0
        %2107 = vmatpush1.msra.mxu0 0.0
        %2108 = vmatprep.subr.mxu0 0.0
        %2109 = vmatpush1.msra.mxu0 0.0
        %2110 = vmatprep.subr.mxu0 0.0
        %2111 = vmatpush1.msra.mxu0 0.0
        %2112 = vmatprep.subr.mxu0 0.0
        %2113 = vmatpush1.msra.mxu0 0.0
        %2114 = vmatprep.subr.mxu0 0.0
        %2115 = vmatpush1.msra.mxu0 0.0
        %2116 = vmatprep.subr.mxu0 0.0
        %2117 = vmatpush1.msra.mxu0 0.0
        %2118 = vmatprep.subr.mxu0 0.0
        %2119 = vmatpush1.msra.mxu0 0.0
        %2120 = vmatprep.subr.mxu0 0.0
        %2121 = vmatpush1.msra.mxu0 0.0
        %2122 = vmatprep.subr.mxu0 0.0
        %2123 = vmatpush1.msra.mxu0 0.0
        %2124 = vmatprep.subr.mxu0 0.0
        %2125 = vmatpush1.msra.mxu0 0.0
        %2126 = vmatprep.subr.mxu0 0.0
        %2127 = vmatpush1.msra.mxu0 0.0
        %2128 = vmatprep.subr.mxu0 0.0
        %2129 = vmatpush1.msra.mxu0 0.0
        %2130 = vmatprep.subr.mxu0 0.0
        %2131 = vmatpush1.msra.mxu0 0.0
        %2132 = vmatprep.mubr.f32.mxu0 0.0
        %2133 = vmatmul.mubr.f32.gmra.mrb[0].mxu0 %v2044
        %v2134 = vpop.f32.mrb[0].mxu0
        %v2135 = vadd.f32 %v2066, %v2134
        %v2136 = vpop.f32.mrb[0].mxu0
        %2137 = vdwg.mxu0
        %v2138 = vadd.f32 %v1850, %v2135
        %2139 = vst.msk [vmem:[%s678] sm:$0xff] %vm693, %v2138
        %s2140 = sand.u32 %s352, 1
        %s2141 = scalar_lea.sflag [#allocation4], %s2140
        %s2142 = sand.u32 %s352, 1
        %s2143 = smul.addr %s2142, 8
        %s2144 = scalar_lea.vmem [#allocation25], %s2143
        // Predicated region
        $region133: #{tpu_custom_call.1} parent=75 // pred_check
          %p2145 = pneg %p362
        $region134: #{tpu_custom_call.1} parent=75 // pred_check_branch
          %2147 = sbr.rel (%p2145) target = $region136
        $region135: #{tpu_custom_call.1} parent=75 // pred_region
          %s2149 = ssub.s32 128, 128
          %2150 = vsyncadd %s2141, %s2149
          %s2151 = smul.addr %s40, 128
          %s2152 = scalar_lea.hbm %s14, %s2151
          %s2154 = sshll.u32 %s2144, 4
          %s2155 = int_to_ptr.vmem [resolvable:$true] %s2154
          %2157 = dma.vmem_to_hbm [thread:$0]  %s2155, 128, %s2152, %s2141
        $region136: #{tpu_custom_call.1} parent=75 // pred_fallthru
          _
      $region76: #{tpu_custom_call.1} parent=5 // pred_fallthru
        _
      %p2158 = scmp.le.s32.totalorder 2, %s35
      // Predicated region
      $region137: #{tpu_custom_call.1} parent=5 // pred_check
        %p2159 = pneg %p2158
      $region138: #{tpu_custom_call.1} parent=5 // pred_check_branch
        %2161 = sbr.rel (%p2159) target = $region140
      $region139: #{tpu_custom_call.1} parent=5 // pred_region
        %s2162 = ssub.s32 %s35, 2
        // Predicated region
        $region141: #{tpu_custom_call.1} parent=139 // pred_check
          %p2163 = pneg %p368
        $region142: #{tpu_custom_call.1} parent=139 // pred_check_branch
          %2165 = sbr.rel (%p2163) target = $region144
        $region143: #{tpu_custom_call.1} parent=139 // pred_region
          %s2166 = sand.u32 %s353, 1
          %s2167 = scalar_lea.sflag [#allocation4], %s2166
          %s2168 = sand.u32 %s353, 1
          %s2169 = smul.addr %s2168, 8
          %s2170 = scalar_lea.vmem [#allocation25], %s2169
          %2171 = dma.done %s2167, 128
        $region144: #{tpu_custom_call.1} parent=139 // pred_fallthru
          _
      $region140: #{tpu_custom_call.1} parent=5 // pred_fallthru
        _
    $region6: #{tpu_custom_call.1} parent=1 // loop_footer
      %s39 = sadd.s32 1, %s35
    $region7: #{tpu_custom_call.1} parent=1 // loop_footer_branch
      %34 = sbr.rel target = $region3
    $region8: #{tpu_custom_call.1} parent=1 // loop_exit
      _
    %2172 = vsyncpa [#allocation3], 1
    %s2173 = scalar_lea.sflag [#allocation3], 1
    %2174 = vsyncpa %s2173, 1
    %2175 = vsyncpa [#allocation6], 1
    %s2176 = scalar_lea.sflag [#allocation6], 1
    %2177 = vsyncpa %s2176, 1
    %2178 = vsyncpa [#allocation9], 1
    %2179 = vsyncpa [#allocation12], 1
    %2180 = vsyncpa [#allocation15], 1
    %2181 = vsyncpa [#allocation18], 1
    %2182 = vsyncpa [#allocation21], 1
    %2183 = vsyncpa [#allocation24], 1
    %2184 = vsyncpa [#allocation4], 1
    %s2185 = scalar_lea.sflag [#allocation4], 1
    %2186 = vsyncpa %s2185, 1

</llo_original>
